<compile_context>
chip_gen: v6e
topology: v6e:2x2x1
jax: 0.10.0
libtpu: 0.0.40
codegen_flags: <defaults>
</compile_context>

<pallas_src>
import numpy as np
import jax
import jax.numpy as jnp
from jax import lax
from jax.experimental import pallas as pl
from jax.experimental.pallas import tpu as pltpu

LANE = 128   # TPU vreg lane width
SUB = 8      # TPU vreg sublane count


def _round_up(x, m):
    return (x + m - 1) // m * m


def _gru_encoder_kernel(emb_ref, len_ref,
                        wih_ref, whh_ref, bih_ref, bhh_ref,
                        whead_ref, bhead_ref, z_ref,
                        out_ref):
    """One batch block of the Encoder forward.

    emb_ref  : [T, TB, E_pad]    time-major embeddings (zero padded)
    len_ref  : [TB, 1]           f32 sequence lengths (0 for padded batch rows)
    wih_ref  : [E_pad, 3*H_pad]  input->gates weights (gate order r|z|n, lane padded)
    whh_ref  : [H_pad, 3*H_pad]  hidden->gates weights
    bih/bhh  : [1, 3*H_pad]
    whead_ref: [H_pad, 2*LANE]   fused mean|logv head (each head in a 128-lane slot)
    bhead_ref: [1, 2*LANE]
    z_ref    : [TB, LANE]        standard-normal sample (lane padded)
    out_ref  : [TB, 3*LANE]      packed lane-dense output: [mean | std | latent]
    """
    T, B, E = emb_ref.shape
    H = whh_ref.shape[0]          # padded hidden size (multiple of 128)

    # ---- Hoisted input projection: ONE matmul for all T steps --------------
    emb_flat = emb_ref[...].reshape(T * B, E)
    gi_all = jnp.dot(emb_flat, wih_ref[...],
                     preferred_element_type=jnp.float32)
    gi_all = gi_all + bih_ref[...]                       # [T*B, 3H]

    whh = whh_ref[...]
    bhh_b = jnp.broadcast_to(bhh_ref[...], (B, 3 * H))   # hoisted bias broadcast
    len_v = len_ref[...]                                 # [B, 1]

    h = jnp.zeros((B, H), jnp.float32)
    pooled = jnp.zeros((B, H), jnp.float32)

    # ---- Fully unrolled recurrence (T is small & static) -------------------
    # Only the h -> h dependence is serial: per step it is a single
    # [B,H]x[H,3H] MXU matmul plus full-vreg, lane-aligned VPU/EUP gate math.
    for t in range(T):
        gi = gi_all[t * B:(t + 1) * B]                                  # [B, 3H]
        gh = jnp.dot(h, whh, preferred_element_type=jnp.float32) + bhh_b
        # PyTorch GRU gate order r, z, n; b_hn stays inside the r*(.) term.
        r = jax.nn.sigmoid(gi[:, 0:H] + gh[:, 0:H])
        zg = jax.nn.sigmoid(gi[:, H:2 * H] + gh[:, H:2 * H])
        n = jnp.tanh(gi[:, 2 * H:3 * H] + r * gh[:, 2 * H:3 * H])
        h_new = (1.0 - zg) * n + zg * h
        # pack_padded_sequence semantics: past the length the state freezes
        # and the (padded) output contributes 0 to the sum-pool.
        m_t = (len_v > jnp.float32(t)).astype(jnp.float32)              # [B, 1]
        h = m_t * h_new + (1.0 - m_t) * h
        pooled = pooled + m_t * h

    # ---- Fused output heads (mean|logv) + reparameterization ---------------
    head = jnp.dot(pooled, whead_ref[...],
                   preferred_element_type=jnp.float32) + bhead_ref[...]  # [B, 2*LANE]
    mean = head[:, 0:LANE]
    logv = head[:, LANE:2 * LANE]
    std = jnp.exp(0.5 * logv)
    lat = z_ref[...] * std + mean
    # Single lane-dense store (384 = 3*128 lanes) -> no masked partial stores.
    out_ref[...] = jnp.concatenate([mean, std, lat], axis=1)


def encoder_forward(embeddings, lengths, params, z):
    """embeddings: [B, T, E] f32 (batch_first), lengths: [B] int32 (<= T),
    z: [B, L] standard-normal sample (stands in for torch.randn_like).
    Returns (latent_sample, mean, std), each [B, L]."""
    B, T, E = embeddings.shape
    H = params["w_hh_l0"].shape[1]
    L = params["rnn2mean_w"].shape[0]
    assert L <= LANE, "latent_size > 128 would need a wider head slot"

    B_pad = _round_up(B, SUB)
    E_pad = _round_up(E, LANE)
    H_pad = _round_up(H, LANE)
    TB = SUB   # batch rows per grid block ("parallel" grid -> v7x dual-TC)

    f32 = jnp.float32

    # -- inputs: time-major, (8,128)-padded -----------------------------------
    emb_tm = jnp.transpose(embeddings.astype(f32), (1, 0, 2))             # [T,B,E]
    emb_tm = jnp.pad(emb_tm, ((0, 0), (0, B_pad - B), (0, E_pad - E)))
    # Padded batch rows get length 0 so their state / pooled sum stays zero.
    len_f = jnp.pad(lengths.astype(f32), (0, B_pad - B))[:, None]         # [B_pad,1]
    z_pad = jnp.pad(z.astype(f32), ((0, B_pad - B), (0, LANE - L)))       # [B_pad,128]

    # -- GRU weights: (in, out) layout, each r/z/n gate padded to H_pad lanes --
    def pad_gate_w(w, in_dim, in_pad):
        w = w.astype(f32).reshape(3, H, in_dim)        # [3, H, in]
        w = jnp.transpose(w, (2, 0, 1))                # [in, 3, H]
        w = jnp.pad(w, ((0, in_pad - in_dim), (0, 0), (0, H_pad - H)))
        return w.reshape(in_pad, 3 * H_pad)

    def pad_gate_b(b):
        b = b.astype(f32).reshape(3, H)
        b = jnp.pad(b, ((0, 0), (0, H_pad - H)))
        return b.reshape(1, 3 * H_pad)

    wih = pad_gate_w(params["w_ih_l0"], E, E_pad)      # [E_pad, 3*H_pad]
    whh = pad_gate_w(params["w_hh_l0"], H, H_pad)      # [H_pad, 3*H_pad]
    bih = pad_gate_b(params["b_ih_l0"])                # [1, 3*H_pad]
    bhh = pad_gate_b(params["b_hh_l0"])

    # -- fused mean|logv head, each head in its own 128-lane slot -------------
    whead = jnp.zeros((H_pad, 2 * LANE), f32)
    whead = whead.at[:H, 0:L].set(params["rnn2mean_w"].astype(f32).T)
    whead = whead.at[:H, LANE:LANE + L].set(params["rnn2logv_w"].astype(f32).T)
    bhead = jnp.zeros((1, 2 * LANE), f32)
    bhead = bhead.at[0, 0:L].set(params["rnn2mean_b"].astype(f32))
    bhead = bhead.at[0, LANE:LANE + L].set(params["rnn2logv_b"].astype(f32))

    grid = (B_pad // TB,)
    in_specs = [
        pl.BlockSpec((T, TB, E_pad), lambda b: (0, b, 0)),       # embeddings
        pl.BlockSpec((TB, 1), lambda b: (b, 0)),                 # lengths
        pl.BlockSpec((E_pad, 3 * H_pad), lambda b: (0, 0)),      # w_ih
        pl.BlockSpec((H_pad, 3 * H_pad), lambda b: (0, 0)),      # w_hh
        pl.BlockSpec((1, 3 * H_pad), lambda b: (0, 0)),          # b_ih
        pl.BlockSpec((1, 3 * H_pad), lambda b: (0, 0)),          # b_hh
        pl.BlockSpec((H_pad, 2 * LANE), lambda b: (0, 0)),       # w_head (mean|logv)
        pl.BlockSpec((1, 2 * LANE), lambda b: (0, 0)),           # b_head
        pl.BlockSpec((TB, LANE), lambda b: (b, 0)),              # z
    ]
    out_spec = pl.BlockSpec((TB, 3 * LANE), lambda b: (b, 0))

    out = pl.pallas_call(
        _gru_encoder_kernel,
        out_shape=jax.ShapeDtypeStruct((B_pad, 3 * LANE), f32),
        grid=grid,
        in_specs=in_specs,
        out_specs=out_spec,
        compiler_params=pltpu.CompilerParams(
            dimension_semantics=("parallel",)),
    )(emb_tm, len_f, wih, whh, bih, bhh, whead, bhead, z_pad)

    mean = out[:B, 0:L]
    std = out[:B, LANE:LANE + L]
    lat = out[:B, 2 * LANE:2 * LANE + L]
    return lat, mean, std


def encoder_ref(embeddings, lengths, params, z):
    """Pure-JAX reference (same math, plain lax.scan, unpadded)."""
    B, T, E = embeddings.shape
    H = params["w_hh_l0"].shape[1]
    wih = params["w_ih_l0"].T
    whh = params["w_hh_l0"].T
    bih = params["b_ih_l0"]
    bhh = params["b_hh_l0"]
    mask = (jnp.arange(T)[None, :] < lengths[:, None]).astype(jnp.float32)   # [B,T]

    def step(carry, t):
        h, pooled = carry
        x_t = embeddings[:, t, :]
        m_t = mask[:, t][:, None]
        gi = x_t @ wih + bih
        gh = h @ whh + bhh
        r = jax.nn.sigmoid(gi[:, :H] + gh[:, :H])
        zg = jax.nn.sigmoid(gi[:, H:2 * H] + gh[:, H:2 * H])
        n = jnp.tanh(gi[:, 2 * H:] + r * gh[:, 2 * H:])
        h_new = (1.0 - zg) * n + zg * h
        h_next = m_t * h_new + (1.0 - m_t) * h
        pooled = pooled + m_t * h_next
        return (h_next, pooled), None

    init = (jnp.zeros((B, H), jnp.float32), jnp.zeros((B, H), jnp.float32))
    (_, pooled), _ = lax.scan(step, init, jnp.arange(T))
    mean = pooled @ params["rnn2mean_w"].T + params["rnn2mean_b"]
    logv = pooled @ params["rnn2logv_w"].T + params["rnn2logv_b"]
    std = jnp.exp(0.5 * logv)
    return z * std + mean, mean, std


if __name__ == "__main__":
    # Small shapes consistent with the module: batch=4, seq=8, embed=32,
    # hidden=32, latent=16, hidden_layers=1.
    B, T, E, H, L = 4, 8, 32, 32, 16
    key = jax.random.PRNGKey(0)
    ks = jax.random.split(key, 10)

    # Deterministic synthetic parameters (PyTorch-shaped).
    params = {
        "w_ih_l0": 0.1 * jax.random.normal(ks[0], (3 * H, E), jnp.float32),
        "w_hh_l0": 0.1 * jax.random.normal(ks[1], (3 * H, H), jnp.float32),
        "b_ih_l0": 0.1 * jax.random.normal(ks[2], (3 * H,), jnp.float32),
        "b_hh_l0": 0.1 * jax.random.normal(ks[3], (3 * H,), jnp.float32),
        "rnn2mean_w": 0.1 * jax.random.normal(ks[4], (L, H), jnp.float32),
        "rnn2mean_b": 0.1 * jax.random.normal(ks[5], (L,), jnp.float32),
        "rnn2logv_w": 0.1 * jax.random.normal(ks[6], (L, H), jnp.float32),
        "rnn2logv_b": 0.1 * jax.random.normal(ks[7], (L,), jnp.float32),
    }

    embeddings = jax.random.normal(ks[8], (B, T, E), jnp.float32)
    lengths = jnp.array([8, 7, 5, 3], dtype=jnp.int32)   # lengths <= T
    # Stand-in for torch.randn_like(mean): a JAX standard-normal sample.
    z = jax.random.normal(ks[9], (B, L), jnp.float32)

    # TODO(synk): multi-layer GRU (hidden_layers > 1) with inter-layer dropout,
    # the pooling in {'max','mean','sum_fingerprints', None/state.view()} paths
    # are not implemented in this kernel (only pooling='sum').

    lat, mean, std = jax.block_until_ready(encoder_forward(embeddings, lengths, params, z))
    lat_r, mean_r, std_r = encoder_ref(embeddings, lengths, params, z)

    np.testing.assert_allclose(np.asarray(mean), np.asarray(mean_r), rtol=1e-4, atol=1e-5)
    np.testing.assert_allclose(np.asarray(std), np.asarray(std_r), rtol=1e-4, atol=1e-5)
    np.testing.assert_allclose(np.asarray(lat), np.asarray(lat_r), rtol=1e-4, atol=1e-5)
    print("KERNEL_OK")
</pallas_src>

<mosaic_0001>
module attributes {stable_mosaic.version = 11 : i64} {
  func.func @_gru_encoder_kernel(%arg0: i32, %arg1: memref<8x8x128xf32, #tpu.memory_space<vmem>>, %arg2: memref<8x1xf32, #tpu.memory_space<vmem>>, %arg3: memref<128x384xf32, #tpu.memory_space<vmem>>, %arg4: memref<128x384xf32, #tpu.memory_space<vmem>>, %arg5: memref<1x384xf32, #tpu.memory_space<vmem>>, %arg6: memref<1x384xf32, #tpu.memory_space<vmem>>, %arg7: memref<128x256xf32, #tpu.memory_space<vmem>>, %arg8: memref<1x256xf32, #tpu.memory_space<vmem>>, %arg9: memref<8x128xf32, #tpu.memory_space<vmem>>, %arg10: memref<8x384xf32, #tpu.memory_space<vmem>>) attributes {dimension_semantics = [#tpu.dimension_semantics<parallel>], iteration_bounds = array<i64: 1>, scalar_prefetch = 0 : i64, scratch_operands = 0 : i64, tpu.core_type = #tpu.core_type<tc>, window_params = [{transform_indices = @transform_0, window_bounds = array<i64: 8, 8, 128>}, {transform_indices = @transform_1, window_bounds = array<i64: 8, 1>}, {pipeline_mode = #tpu.pipeline_mode<synchronous>, transform_indices = @transform_2, window_bounds = array<i64: 128, 384>}, {pipeline_mode = #tpu.pipeline_mode<synchronous>, transform_indices = @transform_3, window_bounds = array<i64: 128, 384>}, {pipeline_mode = #tpu.pipeline_mode<synchronous>, transform_indices = @transform_4, window_bounds = array<i64: 1, 384>}, {pipeline_mode = #tpu.pipeline_mode<synchronous>, transform_indices = @transform_5, window_bounds = array<i64: 1, 384>}, {pipeline_mode = #tpu.pipeline_mode<synchronous>, transform_indices = @transform_6, window_bounds = array<i64: 128, 256>}, {pipeline_mode = #tpu.pipeline_mode<synchronous>, transform_indices = @transform_7, window_bounds = array<i64: 1, 256>}, {transform_indices = @transform_8, window_bounds = array<i64: 8, 128>}, {transform_indices = @transform_9, window_bounds = array<i64: 8, 384>}]} {
    %c0 = arith.constant 0 : index
    %c0_0 = arith.constant 0 : index
    %c0_1 = arith.constant 0 : index
    %0 = vector.load %arg1[%c0, %c0_0, %c0_1] : memref<8x8x128xf32, #tpu.memory_space<vmem>>, vector<8x8x128xf32>
    %1 = vector.shape_cast %0 : vector<8x8x128xf32> to vector<64x128xf32>
    %c0_2 = arith.constant 0 : index
    %c0_3 = arith.constant 0 : index
    %2 = vector.load %arg3[%c0_2, %c0_3] : memref<128x384xf32, #tpu.memory_space<vmem>>, vector<128x384xf32>
    %cst = arith.constant dense<0.000000e+00> : vector<64x384xf32>
    %3 = tpu.matmul %1, %2, %cst {dimension_numbers = #tpu.dot_dimension_numbers<[1], [0], [0], [1], [0, 0, 1, 1], [], []>} : vector<64x128xf32>, vector<128x384xf32>, vector<64x384xf32> -> vector<64x384xf32>
    %c0_4 = arith.constant 0 : index
    %c0_5 = arith.constant 0 : index
    %4 = vector.load %arg5[%c0_4, %c0_5] : memref<1x384xf32, #tpu.memory_space<vmem>>, vector<1x384xf32>
    %5 = vector.broadcast %4 : vector<1x384xf32> to vector<64x384xf32>
    %6 = arith.addf %3, %5 : vector<64x384xf32>
    %c0_6 = arith.constant 0 : index
    %c0_7 = arith.constant 0 : index
    %7 = vector.load %arg4[%c0_6, %c0_7] : memref<128x384xf32, #tpu.memory_space<vmem>>, vector<128x384xf32>
    %c0_8 = arith.constant 0 : index
    %c0_9 = arith.constant 0 : index
    %8 = vector.load %arg6[%c0_8, %c0_9] : memref<1x384xf32, #tpu.memory_space<vmem>>, vector<1x384xf32>
    %9 = vector.shape_cast %8 : vector<1x384xf32> to vector<1x384xf32>
    %10 = vector.broadcast %9 : vector<1x384xf32> to vector<8x384xf32>
    %c0_10 = arith.constant 0 : index
    %c0_11 = arith.constant 0 : index
    %11 = vector.load %arg2[%c0_10, %c0_11] : memref<8x1xf32, #tpu.memory_space<vmem>>, vector<8x1xf32>
    %cst_12 = arith.constant 0.000000e+00 : f32
    %12 = vector.broadcast %cst_12 : f32 to vector<8x128xf32>
    %cst_13 = arith.constant 0.000000e+00 : f32
    %13 = vector.broadcast %cst_13 : f32 to vector<8x128xf32>
    %14 = vector.extract_strided_slice %6 {offsets = [0, 0], sizes = [8, 384], strides = [1, 1]} : vector<64x384xf32> to vector<8x384xf32>
    %cst_14 = arith.constant dense<0.000000e+00> : vector<8x384xf32>
    %15 = tpu.matmul %12, %7, %cst_14 {dimension_numbers = #tpu.dot_dimension_numbers<[1], [0], [0], [1], [0, 0, 1, 1], [], []>} : vector<8x128xf32>, vector<128x384xf32>, vector<8x384xf32> -> vector<8x384xf32>
    %16 = arith.addf %15, %10 : vector<8x384xf32>
    %17 = vector.extract_strided_slice %14 {offsets = [0, 0], sizes = [8, 128], strides = [1, 1]} : vector<8x384xf32> to vector<8x128xf32>
    %18 = vector.extract_strided_slice %16 {offsets = [0, 0], sizes = [8, 128], strides = [1, 1]} : vector<8x384xf32> to vector<8x128xf32>
    %19 = arith.addf %17, %18 : vector<8x128xf32>
    %20 = arith.negf %19 : vector<8x128xf32>
    %21 = math.exp %20 : vector<8x128xf32>
    %cst_15 = arith.constant 1.000000e+00 : f32
    %22 = vector.broadcast %cst_15 : f32 to vector<8x128xf32>
    %23 = arith.addf %22, %21 : vector<8x128xf32>
    %24 = arith.divf %22, %23 : vector<8x128xf32>
    %25 = vector.extract_strided_slice %14 {offsets = [0, 128], sizes = [8, 128], strides = [1, 1]} : vector<8x384xf32> to vector<8x128xf32>
    %26 = vector.extract_strided_slice %16 {offsets = [0, 128], sizes = [8, 128], strides = [1, 1]} : vector<8x384xf32> to vector<8x128xf32>
    %27 = arith.addf %25, %26 : vector<8x128xf32>
    %28 = arith.negf %27 : vector<8x128xf32>
    %29 = math.exp %28 : vector<8x128xf32>
    %cst_16 = arith.constant 1.000000e+00 : f32
    %30 = vector.broadcast %cst_16 : f32 to vector<8x128xf32>
    %31 = arith.addf %30, %29 : vector<8x128xf32>
    %32 = arith.divf %30, %31 : vector<8x128xf32>
    %33 = vector.extract_strided_slice %14 {offsets = [0, 256], sizes = [8, 128], strides = [1, 1]} : vector<8x384xf32> to vector<8x128xf32>
    %34 = vector.extract_strided_slice %16 {offsets = [0, 256], sizes = [8, 128], strides = [1, 1]} : vector<8x384xf32> to vector<8x128xf32>
    %35 = arith.mulf %24, %34 : vector<8x128xf32>
    %36 = arith.addf %33, %35 : vector<8x128xf32>
    %37 = math.tanh %36 : vector<8x128xf32>
    %cst_17 = arith.constant 1.000000e+00 : f32
    %38 = vector.broadcast %cst_17 : f32 to vector<8x128xf32>
    %39 = arith.subf %38, %32 : vector<8x128xf32>
    %40 = arith.mulf %39, %37 : vector<8x128xf32>
    %41 = arith.mulf %32, %12 : vector<8x128xf32>
    %42 = arith.addf %40, %41 : vector<8x128xf32>
    %cst_18 = arith.constant 0.000000e+00 : f32
    %43 = vector.broadcast %cst_18 : f32 to vector<8x1xf32>
    %44 = arith.cmpf ogt, %11, %43 : vector<8x1xf32>
    %45 = arith.extui %44 : vector<8x1xi1> to vector<8x1xi32>
    %46 = arith.sitofp %45 : vector<8x1xi32> to vector<8x1xf32>
    %47 = vector.broadcast %46 : vector<8x1xf32> to vector<8x128xf32>
    %48 = arith.mulf %47, %42 : vector<8x128xf32>
    %cst_19 = arith.constant 1.000000e+00 : f32
    %49 = vector.broadcast %cst_19 : f32 to vector<8x1xf32>
    %50 = arith.subf %49, %46 : vector<8x1xf32>
    %51 = vector.broadcast %50 : vector<8x1xf32> to vector<8x128xf32>
    %52 = arith.mulf %51, %12 : vector<8x128xf32>
    %53 = arith.addf %48, %52 : vector<8x128xf32>
    %54 = vector.broadcast %46 : vector<8x1xf32> to vector<8x128xf32>
    %55 = arith.mulf %54, %53 : vector<8x128xf32>
    %56 = arith.addf %13, %55 : vector<8x128xf32>
    %57 = vector.extract_strided_slice %6 {offsets = [8, 0], sizes = [8, 384], strides = [1, 1]} : vector<64x384xf32> to vector<8x384xf32>
    %cst_20 = arith.constant dense<0.000000e+00> : vector<8x384xf32>
    %58 = tpu.matmul %53, %7, %cst_20 {dimension_numbers = #tpu.dot_dimension_numbers<[1], [0], [0], [1], [0, 0, 1, 1], [], []>} : vector<8x128xf32>, vector<128x384xf32>, vector<8x384xf32> -> vector<8x384xf32>
    %59 = arith.addf %58, %10 : vector<8x384xf32>
    %60 = vector.extract_strided_slice %57 {offsets = [0, 0], sizes = [8, 128], strides = [1, 1]} : vector<8x384xf32> to vector<8x128xf32>
    %61 = vector.extract_strided_slice %59 {offsets = [0, 0], sizes = [8, 128], strides = [1, 1]} : vector<8x384xf32> to vector<8x128xf32>
    %62 = arith.addf %60, %61 : vector<8x128xf32>
    %63 = arith.negf %62 : vector<8x128xf32>
    %64 = math.exp %63 : vector<8x128xf32>
    %cst_21 = arith.constant 1.000000e+00 : f32
    %65 = vector.broadcast %cst_21 : f32 to vector<8x128xf32>
    %66 = arith.addf %65, %64 : vector<8x128xf32>
    %67 = arith.divf %65, %66 : vector<8x128xf32>
    %68 = vector.extract_strided_slice %57 {offsets = [0, 128], sizes = [8, 128], strides = [1, 1]} : vector<8x384xf32> to vector<8x128xf32>
    %69 = vector.extract_strided_slice %59 {offsets = [0, 128], sizes = [8, 128], strides = [1, 1]} : vector<8x384xf32> to vector<8x128xf32>
    %70 = arith.addf %68, %69 : vector<8x128xf32>
    %71 = arith.negf %70 : vector<8x128xf32>
    %72 = math.exp %71 : vector<8x128xf32>
    %cst_22 = arith.constant 1.000000e+00 : f32
    %73 = vector.broadcast %cst_22 : f32 to vector<8x128xf32>
    %74 = arith.addf %73, %72 : vector<8x128xf32>
    %75 = arith.divf %73, %74 : vector<8x128xf32>
    %76 = vector.extract_strided_slice %57 {offsets = [0, 256], sizes = [8, 128], strides = [1, 1]} : vector<8x384xf32> to vector<8x128xf32>
    %77 = vector.extract_strided_slice %59 {offsets = [0, 256], sizes = [8, 128], strides = [1, 1]} : vector<8x384xf32> to vector<8x128xf32>
    %78 = arith.mulf %67, %77 : vector<8x128xf32>
    %79 = arith.addf %76, %78 : vector<8x128xf32>
    %80 = math.tanh %79 : vector<8x128xf32>
    %cst_23 = arith.constant 1.000000e+00 : f32
    %81 = vector.broadcast %cst_23 : f32 to vector<8x128xf32>
    %82 = arith.subf %81, %75 : vector<8x128xf32>
    %83 = arith.mulf %82, %80 : vector<8x128xf32>
    %84 = arith.mulf %75, %53 : vector<8x128xf32>
    %85 = arith.addf %83, %84 : vector<8x128xf32>
    %cst_24 = arith.constant 1.000000e+00 : f32
    %86 = vector.broadcast %cst_24 : f32 to vector<8x1xf32>
    %87 = arith.cmpf ogt, %11, %86 : vector<8x1xf32>
    %88 = arith.extui %87 : vector<8x1xi1> to vector<8x1xi32>
    %89 = arith.sitofp %88 : vector<8x1xi32> to vector<8x1xf32>
    %90 = vector.broadcast %89 : vector<8x1xf32> to vector<8x128xf32>
    %91 = arith.mulf %90, %85 : vector<8x128xf32>
    %cst_25 = arith.constant 1.000000e+00 : f32
    %92 = vector.broadcast %cst_25 : f32 to vector<8x1xf32>
    %93 = arith.subf %92, %89 : vector<8x1xf32>
    %94 = vector.broadcast %93 : vector<8x1xf32> to vector<8x128xf32>
    %95 = arith.mulf %94, %53 : vector<8x128xf32>
    %96 = arith.addf %91, %95 : vector<8x128xf32>
    %97 = vector.broadcast %89 : vector<8x1xf32> to vector<8x128xf32>
    %98 = arith.mulf %97, %96 : vector<8x128xf32>
    %99 = arith.addf %56, %98 : vector<8x128xf32>
    %100 = vector.extract_strided_slice %6 {offsets = [16, 0], sizes = [8, 384], strides = [1, 1]} : vector<64x384xf32> to vector<8x384xf32>
    %cst_26 = arith.constant dense<0.000000e+00> : vector<8x384xf32>
    %101 = tpu.matmul %96, %7, %cst_26 {dimension_numbers = #tpu.dot_dimension_numbers<[1], [0], [0], [1], [0, 0, 1, 1], [], []>} : vector<8x128xf32>, vector<128x384xf32>, vector<8x384xf32> -> vector<8x384xf32>
    %102 = arith.addf %101, %10 : vector<8x384xf32>
    %103 = vector.extract_strided_slice %100 {offsets = [0, 0], sizes = [8, 128], strides = [1, 1]} : vector<8x384xf32> to vector<8x128xf32>
    %104 = vector.extract_strided_slice %102 {offsets = [0, 0], sizes = [8, 128], strides = [1, 1]} : vector<8x384xf32> to vector<8x128xf32>
    %105 = arith.addf %103, %104 : vector<8x128xf32>
    %106 = arith.negf %105 : vector<8x128xf32>
    %107 = math.exp %106 : vector<8x128xf32>
    %cst_27 = arith.constant 1.000000e+00 : f32
    %108 = vector.broadcast %cst_27 : f32 to vector<8x128xf32>
    %109 = arith.addf %108, %107 : vector<8x128xf32>
    %110 = arith.divf %108, %109 : vector<8x128xf32>
    %111 = vector.extract_strided_slice %100 {offsets = [0, 128], sizes = [8, 128], strides = [1, 1]} : vector<8x384xf32> to vector<8x128xf32>
    %112 = vector.extract_strided_slice %102 {offsets = [0, 128], sizes = [8, 128], strides = [1, 1]} : vector<8x384xf32> to vector<8x128xf32>
    %113 = arith.addf %111, %112 : vector<8x128xf32>
    %114 = arith.negf %113 : vector<8x128xf32>
    %115 = math.exp %114 : vector<8x128xf32>
    %cst_28 = arith.constant 1.000000e+00 : f32
    %116 = vector.broadcast %cst_28 : f32 to vector<8x128xf32>
    %117 = arith.addf %116, %115 : vector<8x128xf32>
    %118 = arith.divf %116, %117 : vector<8x128xf32>
    %119 = vector.extract_strided_slice %100 {offsets = [0, 256], sizes = [8, 128], strides = [1, 1]} : vector<8x384xf32> to vector<8x128xf32>
    %120 = vector.extract_strided_slice %102 {offsets = [0, 256], sizes = [8, 128], strides = [1, 1]} : vector<8x384xf32> to vector<8x128xf32>
    %121 = arith.mulf %110, %120 : vector<8x128xf32>
    %122 = arith.addf %119, %121 : vector<8x128xf32>
    %123 = math.tanh %122 : vector<8x128xf32>
    %cst_29 = arith.constant 1.000000e+00 : f32
    %124 = vector.broadcast %cst_29 : f32 to vector<8x128xf32>
    %125 = arith.subf %124, %118 : vector<8x128xf32>
    %126 = arith.mulf %125, %123 : vector<8x128xf32>
    %127 = arith.mulf %118, %96 : vector<8x128xf32>
    %128 = arith.addf %126, %127 : vector<8x128xf32>
    %cst_30 = arith.constant 2.000000e+00 : f32
    %129 = vector.broadcast %cst_30 : f32 to vector<8x1xf32>
    %130 = arith.cmpf ogt, %11, %129 : vector<8x1xf32>
    %131 = arith.extui %130 : vector<8x1xi1> to vector<8x1xi32>
    %132 = arith.sitofp %131 : vector<8x1xi32> to vector<8x1xf32>
    %133 = vector.broadcast %132 : vector<8x1xf32> to vector<8x128xf32>
    %134 = arith.mulf %133, %128 : vector<8x128xf32>
    %cst_31 = arith.constant 1.000000e+00 : f32
    %135 = vector.broadcast %cst_31 : f32 to vector<8x1xf32>
    %136 = arith.subf %135, %132 : vector<8x1xf32>
    %137 = vector.broadcast %136 : vector<8x1xf32> to vector<8x128xf32>
    %138 = arith.mulf %137, %96 : vector<8x128xf32>
    %139 = arith.addf %134, %138 : vector<8x128xf32>
    %140 = vector.broadcast %132 : vector<8x1xf32> to vector<8x128xf32>
    %141 = arith.mulf %140, %139 : vector<8x128xf32>
    %142 = arith.addf %99, %141 : vector<8x128xf32>
    %143 = vector.extract_strided_slice %6 {offsets = [24, 0], sizes = [8, 384], strides = [1, 1]} : vector<64x384xf32> to vector<8x384xf32>
    %cst_32 = arith.constant dense<0.000000e+00> : vector<8x384xf32>
    %144 = tpu.matmul %139, %7, %cst_32 {dimension_numbers = #tpu.dot_dimension_numbers<[1], [0], [0], [1], [0, 0, 1, 1], [], []>} : vector<8x128xf32>, vector<128x384xf32>, vector<8x384xf32> -> vector<8x384xf32>
    %145 = arith.addf %144, %10 : vector<8x384xf32>
    %146 = vector.extract_strided_slice %143 {offsets = [0, 0], sizes = [8, 128], strides = [1, 1]} : vector<8x384xf32> to vector<8x128xf32>
    %147 = vector.extract_strided_slice %145 {offsets = [0, 0], sizes = [8, 128], strides = [1, 1]} : vector<8x384xf32> to vector<8x128xf32>
    %148 = arith.addf %146, %147 : vector<8x128xf32>
    %149 = arith.negf %148 : vector<8x128xf32>
    %150 = math.exp %149 : vector<8x128xf32>
    %cst_33 = arith.constant 1.000000e+00 : f32
    %151 = vector.broadcast %cst_33 : f32 to vector<8x128xf32>
    %152 = arith.addf %151, %150 : vector<8x128xf32>
    %153 = arith.divf %151, %152 : vector<8x128xf32>
    %154 = vector.extract_strided_slice %143 {offsets = [0, 128], sizes = [8, 128], strides = [1, 1]} : vector<8x384xf32> to vector<8x128xf32>
    %155 = vector.extract_strided_slice %145 {offsets = [0, 128], sizes = [8, 128], strides = [1, 1]} : vector<8x384xf32> to vector<8x128xf32>
    %156 = arith.addf %154, %155 : vector<8x128xf32>
    %157 = arith.negf %156 : vector<8x128xf32>
    %158 = math.exp %157 : vector<8x128xf32>
    %cst_34 = arith.constant 1.000000e+00 : f32
    %159 = vector.broadcast %cst_34 : f32 to vector<8x128xf32>
    %160 = arith.addf %159, %158 : vector<8x128xf32>
    %161 = arith.divf %159, %160 : vector<8x128xf32>
    %162 = vector.extract_strided_slice %143 {offsets = [0, 256], sizes = [8, 128], strides = [1, 1]} : vector<8x384xf32> to vector<8x128xf32>
    %163 = vector.extract_strided_slice %145 {offsets = [0, 256], sizes = [8, 128], strides = [1, 1]} : vector<8x384xf32> to vector<8x128xf32>
    %164 = arith.mulf %153, %163 : vector<8x128xf32>
    %165 = arith.addf %162, %164 : vector<8x128xf32>
    %166 = math.tanh %165 : vector<8x128xf32>
    %cst_35 = arith.constant 1.000000e+00 : f32
    %167 = vector.broadcast %cst_35 : f32 to vector<8x128xf32>
    %168 = arith.subf %167, %161 : vector<8x128xf32>
    %169 = arith.mulf %168, %166 : vector<8x128xf32>
    %170 = arith.mulf %161, %139 : vector<8x128xf32>
    %171 = arith.addf %169, %170 : vector<8x128xf32>
    %cst_36 = arith.constant 3.000000e+00 : f32
    %172 = vector.broadcast %cst_36 : f32 to vector<8x1xf32>
    %173 = arith.cmpf ogt, %11, %172 : vector<8x1xf32>
    %174 = arith.extui %173 : vector<8x1xi1> to vector<8x1xi32>
    %175 = arith.sitofp %174 : vector<8x1xi32> to vector<8x1xf32>
    %176 = vector.broadcast %175 : vector<8x1xf32> to vector<8x128xf32>
    %177 = arith.mulf %176, %171 : vector<8x128xf32>
    %cst_37 = arith.constant 1.000000e+00 : f32
    %178 = vector.broadcast %cst_37 : f32 to vector<8x1xf32>
    %179 = arith.subf %178, %175 : vector<8x1xf32>
    %180 = vector.broadcast %179 : vector<8x1xf32> to vector<8x128xf32>
    %181 = arith.mulf %180, %139 : vector<8x128xf32>
    %182 = arith.addf %177, %181 : vector<8x128xf32>
    %183 = vector.broadcast %175 : vector<8x1xf32> to vector<8x128xf32>
    %184 = arith.mulf %183, %182 : vector<8x128xf32>
    %185 = arith.addf %142, %184 : vector<8x128xf32>
    %186 = vector.extract_strided_slice %6 {offsets = [32, 0], sizes = [8, 384], strides = [1, 1]} : vector<64x384xf32> to vector<8x384xf32>
    %cst_38 = arith.constant dense<0.000000e+00> : vector<8x384xf32>
    %187 = tpu.matmul %182, %7, %cst_38 {dimension_numbers = #tpu.dot_dimension_numbers<[1], [0], [0], [1], [0, 0, 1, 1], [], []>} : vector<8x128xf32>, vector<128x384xf32>, vector<8x384xf32> -> vector<8x384xf32>
    %188 = arith.addf %187, %10 : vector<8x384xf32>
    %189 = vector.extract_strided_slice %186 {offsets = [0, 0], sizes = [8, 128], strides = [1, 1]} : vector<8x384xf32> to vector<8x128xf32>
    %190 = vector.extract_strided_slice %188 {offsets = [0, 0], sizes = [8, 128], strides = [1, 1]} : vector<8x384xf32> to vector<8x128xf32>
    %191 = arith.addf %189, %190 : vector<8x128xf32>
    %192 = arith.negf %191 : vector<8x128xf32>
    %193 = math.exp %192 : vector<8x128xf32>
    %cst_39 = arith.constant 1.000000e+00 : f32
    %194 = vector.broadcast %cst_39 : f32 to vector<8x128xf32>
    %195 = arith.addf %194, %193 : vector<8x128xf32>
    %196 = arith.divf %194, %195 : vector<8x128xf32>
    %197 = vector.extract_strided_slice %186 {offsets = [0, 128], sizes = [8, 128], strides = [1, 1]} : vector<8x384xf32> to vector<8x128xf32>
    %198 = vector.extract_strided_slice %188 {offsets = [0, 128], sizes = [8, 128], strides = [1, 1]} : vector<8x384xf32> to vector<8x128xf32>
    %199 = arith.addf %197, %198 : vector<8x128xf32>
    %200 = arith.negf %199 : vector<8x128xf32>
    %201 = math.exp %200 : vector<8x128xf32>
    %cst_40 = arith.constant 1.000000e+00 : f32
    %202 = vector.broadcast %cst_40 : f32 to vector<8x128xf32>
    %203 = arith.addf %202, %201 : vector<8x128xf32>
    %204 = arith.divf %202, %203 : vector<8x128xf32>
    %205 = vector.extract_strided_slice %186 {offsets = [0, 256], sizes = [8, 128], strides = [1, 1]} : vector<8x384xf32> to vector<8x128xf32>
    %206 = vector.extract_strided_slice %188 {offsets = [0, 256], sizes = [8, 128], strides = [1, 1]} : vector<8x384xf32> to vector<8x128xf32>
    %207 = arith.mulf %196, %206 : vector<8x128xf32>
    %208 = arith.addf %205, %207 : vector<8x128xf32>
    %209 = math.tanh %208 : vector<8x128xf32>
    %cst_41 = arith.constant 1.000000e+00 : f32
    %210 = vector.broadcast %cst_41 : f32 to vector<8x128xf32>
    %211 = arith.subf %210, %204 : vector<8x128xf32>
    %212 = arith.mulf %211, %209 : vector<8x128xf32>
    %213 = arith.mulf %204, %182 : vector<8x128xf32>
    %214 = arith.addf %212, %213 : vector<8x128xf32>
    %cst_42 = arith.constant 4.000000e+00 : f32
    %215 = vector.broadcast %cst_42 : f32 to vector<8x1xf32>
    %216 = arith.cmpf ogt, %11, %215 : vector<8x1xf32>
    %217 = arith.extui %216 : vector<8x1xi1> to vector<8x1xi32>
    %218 = arith.sitofp %217 : vector<8x1xi32> to vector<8x1xf32>
    %219 = vector.broadcast %218 : vector<8x1xf32> to vector<8x128xf32>
    %220 = arith.mulf %219, %214 : vector<8x128xf32>
    %cst_43 = arith.constant 1.000000e+00 : f32
    %221 = vector.broadcast %cst_43 : f32 to vector<8x1xf32>
    %222 = arith.subf %221, %218 : vector<8x1xf32>
    %223 = vector.broadcast %222 : vector<8x1xf32> to vector<8x128xf32>
    %224 = arith.mulf %223, %182 : vector<8x128xf32>
    %225 = arith.addf %220, %224 : vector<8x128xf32>
    %226 = vector.broadcast %218 : vector<8x1xf32> to vector<8x128xf32>
    %227 = arith.mulf %226, %225 : vector<8x128xf32>
    %228 = arith.addf %185, %227 : vector<8x128xf32>
    %229 = vector.extract_strided_slice %6 {offsets = [40, 0], sizes = [8, 384], strides = [1, 1]} : vector<64x384xf32> to vector<8x384xf32>
    %cst_44 = arith.constant dense<0.000000e+00> : vector<8x384xf32>
    %230 = tpu.matmul %225, %7, %cst_44 {dimension_numbers = #tpu.dot_dimension_numbers<[1], [0], [0], [1], [0, 0, 1, 1], [], []>} : vector<8x128xf32>, vector<128x384xf32>, vector<8x384xf32> -> vector<8x384xf32>
    %231 = arith.addf %230, %10 : vector<8x384xf32>
    %232 = vector.extract_strided_slice %229 {offsets = [0, 0], sizes = [8, 128], strides = [1, 1]} : vector<8x384xf32> to vector<8x128xf32>
    %233 = vector.extract_strided_slice %231 {offsets = [0, 0], sizes = [8, 128], strides = [1, 1]} : vector<8x384xf32> to vector<8x128xf32>
    %234 = arith.addf %232, %233 : vector<8x128xf32>
    %235 = arith.negf %234 : vector<8x128xf32>
    %236 = math.exp %235 : vector<8x128xf32>
    %cst_45 = arith.constant 1.000000e+00 : f32
    %237 = vector.broadcast %cst_45 : f32 to vector<8x128xf32>
    %238 = arith.addf %237, %236 : vector<8x128xf32>
    %239 = arith.divf %237, %238 : vector<8x128xf32>
    %240 = vector.extract_strided_slice %229 {offsets = [0, 128], sizes = [8, 128], strides = [1, 1]} : vector<8x384xf32> to vector<8x128xf32>
    %241 = vector.extract_strided_slice %231 {offsets = [0, 128], sizes = [8, 128], strides = [1, 1]} : vector<8x384xf32> to vector<8x128xf32>
    %242 = arith.addf %240, %241 : vector<8x128xf32>
    %243 = arith.negf %242 : vector<8x128xf32>
    %244 = math.exp %243 : vector<8x128xf32>
    %cst_46 = arith.constant 1.000000e+00 : f32
    %245 = vector.broadcast %cst_46 : f32 to vector<8x128xf32>
    %246 = arith.addf %245, %244 : vector<8x128xf32>
    %247 = arith.divf %245, %246 : vector<8x128xf32>
    %248 = vector.extract_strided_slice %229 {offsets = [0, 256], sizes = [8, 128], strides = [1, 1]} : vector<8x384xf32> to vector<8x128xf32>
    %249 = vector.extract_strided_slice %231 {offsets = [0, 256], sizes = [8, 128], strides = [1, 1]} : vector<8x384xf32> to vector<8x128xf32>
    %250 = arith.mulf %239, %249 : vector<8x128xf32>
    %251 = arith.addf %248, %250 : vector<8x128xf32>
    %252 = math.tanh %251 : vector<8x128xf32>
    %cst_47 = arith.constant 1.000000e+00 : f32
    %253 = vector.broadcast %cst_47 : f32 to vector<8x128xf32>
    %254 = arith.subf %253, %247 : vector<8x128xf32>
    %255 = arith.mulf %254, %252 : vector<8x128xf32>
    %256 = arith.mulf %247, %225 : vector<8x128xf32>
    %257 = arith.addf %255, %256 : vector<8x128xf32>
    %cst_48 = arith.constant 5.000000e+00 : f32
    %258 = vector.broadcast %cst_48 : f32 to vector<8x1xf32>
    %259 = arith.cmpf ogt, %11, %258 : vector<8x1xf32>
    %260 = arith.extui %259 : vector<8x1xi1> to vector<8x1xi32>
    %261 = arith.sitofp %260 : vector<8x1xi32> to vector<8x1xf32>
    %262 = vector.broadcast %261 : vector<8x1xf32> to vector<8x128xf32>
    %263 = arith.mulf %262, %257 : vector<8x128xf32>
    %cst_49 = arith.constant 1.000000e+00 : f32
    %264 = vector.broadcast %cst_49 : f32 to vector<8x1xf32>
    %265 = arith.subf %264, %261 : vector<8x1xf32>
    %266 = vector.broadcast %265 : vector<8x1xf32> to vector<8x128xf32>
    %267 = arith.mulf %266, %225 : vector<8x128xf32>
    %268 = arith.addf %263, %267 : vector<8x128xf32>
    %269 = vector.broadcast %261 : vector<8x1xf32> to vector<8x128xf32>
    %270 = arith.mulf %269, %268 : vector<8x128xf32>
    %271 = arith.addf %228, %270 : vector<8x128xf32>
    %272 = vector.extract_strided_slice %6 {offsets = [48, 0], sizes = [8, 384], strides = [1, 1]} : vector<64x384xf32> to vector<8x384xf32>
    %cst_50 = arith.constant dense<0.000000e+00> : vector<8x384xf32>
    %273 = tpu.matmul %268, %7, %cst_50 {dimension_numbers = #tpu.dot_dimension_numbers<[1], [0], [0], [1], [0, 0, 1, 1], [], []>} : vector<8x128xf32>, vector<128x384xf32>, vector<8x384xf32> -> vector<8x384xf32>
    %274 = arith.addf %273, %10 : vector<8x384xf32>
    %275 = vector.extract_strided_slice %272 {offsets = [0, 0], sizes = [8, 128], strides = [1, 1]} : vector<8x384xf32> to vector<8x128xf32>
    %276 = vector.extract_strided_slice %274 {offsets = [0, 0], sizes = [8, 128], strides = [1, 1]} : vector<8x384xf32> to vector<8x128xf32>
    %277 = arith.addf %275, %276 : vector<8x128xf32>
    %278 = arith.negf %277 : vector<8x128xf32>
    %279 = math.exp %278 : vector<8x128xf32>
    %cst_51 = arith.constant 1.000000e+00 : f32
    %280 = vector.broadcast %cst_51 : f32 to vector<8x128xf32>
    %281 = arith.addf %280, %279 : vector<8x128xf32>
    %282 = arith.divf %280, %281 : vector<8x128xf32>
    %283 = vector.extract_strided_slice %272 {offsets = [0, 128], sizes = [8, 128], strides = [1, 1]} : vector<8x384xf32> to vector<8x128xf32>
    %284 = vector.extract_strided_slice %274 {offsets = [0, 128], sizes = [8, 128], strides = [1, 1]} : vector<8x384xf32> to vector<8x128xf32>
    %285 = arith.addf %283, %284 : vector<8x128xf32>
    %286 = arith.negf %285 : vector<8x128xf32>
    %287 = math.exp %286 : vector<8x128xf32>
    %cst_52 = arith.constant 1.000000e+00 : f32
    %288 = vector.broadcast %cst_52 : f32 to vector<8x128xf32>
    %289 = arith.addf %288, %287 : vector<8x128xf32>
    %290 = arith.divf %288, %289 : vector<8x128xf32>
    %291 = vector.extract_strided_slice %272 {offsets = [0, 256], sizes = [8, 128], strides = [1, 1]} : vector<8x384xf32> to vector<8x128xf32>
    %292 = vector.extract_strided_slice %274 {offsets = [0, 256], sizes = [8, 128], strides = [1, 1]} : vector<8x384xf32> to vector<8x128xf32>
    %293 = arith.mulf %282, %292 : vector<8x128xf32>
    %294 = arith.addf %291, %293 : vector<8x128xf32>
    %295 = math.tanh %294 : vector<8x128xf32>
    %cst_53 = arith.constant 1.000000e+00 : f32
    %296 = vector.broadcast %cst_53 : f32 to vector<8x128xf32>
    %297 = arith.subf %296, %290 : vector<8x128xf32>
    %298 = arith.mulf %297, %295 : vector<8x128xf32>
    %299 = arith.mulf %290, %268 : vector<8x128xf32>
    %300 = arith.addf %298, %299 : vector<8x128xf32>
    %cst_54 = arith.constant 6.000000e+00 : f32
    %301 = vector.broadcast %cst_54 : f32 to vector<8x1xf32>
    %302 = arith.cmpf ogt, %11, %301 : vector<8x1xf32>
    %303 = arith.extui %302 : vector<8x1xi1> to vector<8x1xi32>
    %304 = arith.sitofp %303 : vector<8x1xi32> to vector<8x1xf32>
    %305 = vector.broadcast %304 : vector<8x1xf32> to vector<8x128xf32>
    %306 = arith.mulf %305, %300 : vector<8x128xf32>
    %cst_55 = arith.constant 1.000000e+00 : f32
    %307 = vector.broadcast %cst_55 : f32 to vector<8x1xf32>
    %308 = arith.subf %307, %304 : vector<8x1xf32>
    %309 = vector.broadcast %308 : vector<8x1xf32> to vector<8x128xf32>
    %310 = arith.mulf %309, %268 : vector<8x128xf32>
    %311 = arith.addf %306, %310 : vector<8x128xf32>
    %312 = vector.broadcast %304 : vector<8x1xf32> to vector<8x128xf32>
    %313 = arith.mulf %312, %311 : vector<8x128xf32>
    %314 = arith.addf %271, %313 : vector<8x128xf32>
    %315 = vector.extract_strided_slice %6 {offsets = [56, 0], sizes = [8, 384], strides = [1, 1]} : vector<64x384xf32> to vector<8x384xf32>
    %cst_56 = arith.constant dense<0.000000e+00> : vector<8x384xf32>
    %316 = tpu.matmul %311, %7, %cst_56 {dimension_numbers = #tpu.dot_dimension_numbers<[1], [0], [0], [1], [0, 0, 1, 1], [], []>} : vector<8x128xf32>, vector<128x384xf32>, vector<8x384xf32> -> vector<8x384xf32>
    %317 = arith.addf %316, %10 : vector<8x384xf32>
    %318 = vector.extract_strided_slice %315 {offsets = [0, 0], sizes = [8, 128], strides = [1, 1]} : vector<8x384xf32> to vector<8x128xf32>
    %319 = vector.extract_strided_slice %317 {offsets = [0, 0], sizes = [8, 128], strides = [1, 1]} : vector<8x384xf32> to vector<8x128xf32>
    %320 = arith.addf %318, %319 : vector<8x128xf32>
    %321 = arith.negf %320 : vector<8x128xf32>
    %322 = math.exp %321 : vector<8x128xf32>
    %cst_57 = arith.constant 1.000000e+00 : f32
    %323 = vector.broadcast %cst_57 : f32 to vector<8x128xf32>
    %324 = arith.addf %323, %322 : vector<8x128xf32>
    %325 = arith.divf %323, %324 : vector<8x128xf32>
    %326 = vector.extract_strided_slice %315 {offsets = [0, 128], sizes = [8, 128], strides = [1, 1]} : vector<8x384xf32> to vector<8x128xf32>
    %327 = vector.extract_strided_slice %317 {offsets = [0, 128], sizes = [8, 128], strides = [1, 1]} : vector<8x384xf32> to vector<8x128xf32>
    %328 = arith.addf %326, %327 : vector<8x128xf32>
    %329 = arith.negf %328 : vector<8x128xf32>
    %330 = math.exp %329 : vector<8x128xf32>
    %cst_58 = arith.constant 1.000000e+00 : f32
    %331 = vector.broadcast %cst_58 : f32 to vector<8x128xf32>
    %332 = arith.addf %331, %330 : vector<8x128xf32>
    %333 = arith.divf %331, %332 : vector<8x128xf32>
    %334 = vector.extract_strided_slice %315 {offsets = [0, 256], sizes = [8, 128], strides = [1, 1]} : vector<8x384xf32> to vector<8x128xf32>
    %335 = vector.extract_strided_slice %317 {offsets = [0, 256], sizes = [8, 128], strides = [1, 1]} : vector<8x384xf32> to vector<8x128xf32>
    %336 = arith.mulf %325, %335 : vector<8x128xf32>
    %337 = arith.addf %334, %336 : vector<8x128xf32>
    %338 = math.tanh %337 : vector<8x128xf32>
    %cst_59 = arith.constant 1.000000e+00 : f32
    %339 = vector.broadcast %cst_59 : f32 to vector<8x128xf32>
    %340 = arith.subf %339, %333 : vector<8x128xf32>
    %341 = arith.mulf %340, %338 : vector<8x128xf32>
    %342 = arith.mulf %333, %311 : vector<8x128xf32>
    %343 = arith.addf %341, %342 : vector<8x128xf32>
    %cst_60 = arith.constant 7.000000e+00 : f32
    %344 = vector.broadcast %cst_60 : f32 to vector<8x1xf32>
    %345 = arith.cmpf ogt, %11, %344 : vector<8x1xf32>
    %346 = arith.extui %345 : vector<8x1xi1> to vector<8x1xi32>
    %347 = arith.sitofp %346 : vector<8x1xi32> to vector<8x1xf32>
    %348 = vector.broadcast %347 : vector<8x1xf32> to vector<8x128xf32>
    %349 = arith.mulf %348, %343 : vector<8x128xf32>
    %cst_61 = arith.constant 1.000000e+00 : f32
    %350 = vector.broadcast %cst_61 : f32 to vector<8x1xf32>
    %351 = arith.subf %350, %347 : vector<8x1xf32>
    %352 = vector.broadcast %351 : vector<8x1xf32> to vector<8x128xf32>
    %353 = arith.mulf %352, %311 : vector<8x128xf32>
    %354 = arith.addf %349, %353 : vector<8x128xf32>
    %355 = vector.broadcast %347 : vector<8x1xf32> to vector<8x128xf32>
    %356 = arith.mulf %355, %354 : vector<8x128xf32>
    %357 = arith.addf %314, %356 : vector<8x128xf32>
    %c0_62 = arith.constant 0 : index
    %c0_63 = arith.constant 0 : index
    %358 = vector.load %arg7[%c0_62, %c0_63] : memref<128x256xf32, #tpu.memory_space<vmem>>, vector<128x256xf32>
    %cst_64 = arith.constant dense<0.000000e+00> : vector<8x256xf32>
    %359 = tpu.matmul %357, %358, %cst_64 {dimension_numbers = #tpu.dot_dimension_numbers<[1], [0], [0], [1], [0, 0, 1, 1], [], []>} : vector<8x128xf32>, vector<128x256xf32>, vector<8x256xf32> -> vector<8x256xf32>
    %c0_65 = arith.constant 0 : index
    %c0_66 = arith.constant 0 : index
    %360 = vector.load %arg8[%c0_65, %c0_66] : memref<1x256xf32, #tpu.memory_space<vmem>>, vector<1x256xf32>
    %361 = vector.broadcast %360 : vector<1x256xf32> to vector<8x256xf32>
    %362 = arith.addf %359, %361 : vector<8x256xf32>
    %363 = vector.extract_strided_slice %362 {offsets = [0, 0], sizes = [8, 128], strides = [1, 1]} : vector<8x256xf32> to vector<8x128xf32>
    %364 = vector.extract_strided_slice %362 {offsets = [0, 128], sizes = [8, 128], strides = [1, 1]} : vector<8x256xf32> to vector<8x128xf32>
    %cst_67 = arith.constant 5.000000e-01 : f32
    %365 = vector.broadcast %cst_67 : f32 to vector<8x128xf32>
    %366 = arith.mulf %365, %364 : vector<8x128xf32>
    %367 = math.exp %366 : vector<8x128xf32>
    %c0_68 = arith.constant 0 : index
    %c0_69 = arith.constant 0 : index
    %368 = vector.load %arg9[%c0_68, %c0_69] : memref<8x128xf32, #tpu.memory_space<vmem>>, vector<8x128xf32>
    %369 = arith.mulf %368, %367 : vector<8x128xf32>
    %370 = arith.addf %369, %363 : vector<8x128xf32>
    %371 = tpu.concatenate %363, %367, %370 in 1 : vector<8x128xf32>, vector<8x128xf32>, vector<8x128xf32> -> vector<8x384xf32>
    %c0_70 = arith.constant 0 : index
    %c0_71 = arith.constant 0 : index
    %372 = vector.load %arg10[%c0_70, %c0_71] : memref<8x384xf32, #tpu.memory_space<vmem>>, vector<8x384xf32>
    tpu.vector_store %arg10[%c0_70, %c0_71], %371 {strides = array<i32>} : memref<8x384xf32, #tpu.memory_space<vmem>>, vector<8x384xf32>,
    return
  }
  func.func @transform_0(%arg0: i32) -> (i32, i32, i32) {
    %c0_i32 = arith.constant 0 : i32
    %c0_i32_0 = arith.constant 0 : i32
    %c0_i32_1 = arith.constant 0 : i32
    return %c0_i32, %arg0, %c0_i32_0 : i32, i32, i32
  }
  func.func @transform_1(%arg0: i32) -> (i32, i32) {
    %c0_i32 = arith.constant 0 : i32
    %c0_i32_0 = arith.constant 0 : i32
    return %arg0, %c0_i32 : i32, i32
  }
  func.func @transform_2(%arg0: i32) -> (i32, i32) {
    %c0_i32 = arith.constant 0 : i32
    %c0_i32_0 = arith.constant 0 : i32
    %c0_i32_1 = arith.constant 0 : i32
    return %c0_i32, %c0_i32_0 : i32, i32
  }
  func.func @transform_3(%arg0: i32) -> (i32, i32) {
    %c0_i32 = arith.constant 0 : i32
    %c0_i32_0 = arith.constant 0 : i32
    %c0_i32_1 = arith.constant 0 : i32
    return %c0_i32, %c0_i32_0 : i32, i32
  }
  func.func @transform_4(%arg0: i32) -> (i32, i32) {
    %c0_i32 = arith.constant 0 : i32
    %c0_i32_0 = arith.constant 0 : i32
    %c0_i32_1 = arith.constant 0 : i32
    return %c0_i32, %c0_i32_0 : i32, i32
  }
  func.func @transform_5(%arg0: i32) -> (i32, i32) {
    %c0_i32 = arith.constant 0 : i32
    %c0_i32_0 = arith.constant 0 : i32
    %c0_i32_1 = arith.constant 0 : i32
    return %c0_i32, %c0_i32_0 : i32, i32
  }
  func.func @transform_6(%arg0: i32) -> (i32, i32) {
    %c0_i32 = arith.constant 0 : i32
    %c0_i32_0 = arith.constant 0 : i32
    %c0_i32_1 = arith.constant 0 : i32
    return %c0_i32, %c0_i32_0 : i32, i32
  }
  func.func @transform_7(%arg0: i32) -> (i32, i32) {
    %c0_i32 = arith.constant 0 : i32
    %c0_i32_0 = arith.constant 0 : i32
    %c0_i32_1 = arith.constant 0 : i32
    return %c0_i32, %c0_i32_0 : i32, i32
  }
  func.func @transform_8(%arg0: i32) -> (i32, i32) {
    %c0_i32 = arith.constant 0 : i32
    %c0_i32_0 = arith.constant 0 : i32
    return %arg0, %c0_i32 : i32, i32
  }
  func.func @transform_9(%arg0: i32) -> (i32, i32) {
    %c0_i32 = arith.constant 0 : i32
    %c0_i32_0 = arith.constant 0 : i32
    return %arg0, %c0_i32 : i32, i32
  }
}

</mosaic_0001>

<llo_original>
// kernel: tpu_custom_call.1
$region0: #{tpu_custom_call.1}
  #allocation0 [shape = 'u32[]', space=smem, size = 0x4, offset = 0x4, fixed_abs, tag = 'smem constant byte address 0x4 - core index']
  #allocation1 [shape = 'u32[144,128]{1,0:T(1,128)}', space=vmem, size = 0x12000, scoped, tag = 'internal scratch']
  %s0 = inlined_call_operand.hbm [shape: f32[8,8,128], index: 0, kind: input, shape index: {}]
  %s1 = inlined_call_operand.vmem [shape: f32[8,1], index: 1, kind: input, shape index: {}]
  %s2 = inlined_call_operand.hbm [shape: f32[128,384], index: 2, kind: input, shape index: {}]
  %s3 = inlined_call_operand.hbm [shape: f32[128,384], index: 3, kind: input, shape index: {}]
  %s4 = inlined_call_operand.vmem [shape: f32[1,384], index: 4, kind: input, shape index: {}]
  %s5 = inlined_call_operand.vmem [shape: f32[1,384], index: 5, kind: input, shape index: {}]
  %s6 = inlined_call_operand.hbm [shape: f32[128,256], index: 6, kind: input, shape index: {}]
  %s7 = inlined_call_operand.vmem [shape: f32[1,256], index: 7, kind: input, shape index: {}]
  %s8 = inlined_call_operand.vmem [shape: f32[8,128], index: 8, kind: input, shape index: {}]
  %s9 = inlined_call_operand.hbm [shape: f32[8,384], index: 9, kind: output, shape index: {}]
  %s10 = sld [smem:[#allocation0]]
  $region62: #{tpu_custom_call.1} parent=0
    _
  %s12 = ssub.s32 1, %s10
  %s13 = scalar_select 0, %s12, %s10
  $region1: #{tpu_custom_call.1} parent=0
    #allocation2 [shape = 'u8[32768]{0}', space=vmem, size = 0x8000, scoped, tag = 'input window, operand 0, single buffered']
    #allocation3 [shape = 's32[1]{0}', space=sflag, size = 0x4, scoped, tag = 'scoped memory for tpu_custom_call.1']
    #allocation4 [shape = 's32[1]{0}', space=sflag, size = 0x4, scoped, tag = 'scoped memory for tpu_custom_call.1']
    #allocation5 [shape = 'u8[196608]{0}', space=vmem, size = 0x30000, scoped, tag = 'input window, operand 2, single buffered']
    #allocation6 [shape = 's32[1]{0}', space=sflag, size = 0x4, scoped, tag = 'scoped memory for tpu_custom_call.1']
    #allocation7 [shape = 'u8[196608]{0}', space=vmem, size = 0x30000, scoped, tag = 'input window, operand 3, single buffered']
    #allocation8 [shape = 'u8[131072]{0}', space=vmem, size = 0x20000, scoped, tag = 'input window, operand 6, single buffered']
    #allocation9 [shape = 's32[1]{0}', space=sflag, size = 0x4, scoped, tag = 'scoped memory for tpu_custom_call.1']
    #allocation10 [shape = 'u8[12288]{0}', space=vmem, size = 0x3000, scoped, tag = 'output window, operand 0, single buffered']
    %14 = vsyncpa [#allocation3], 0
    %15 = vsyncpa [#allocation6], 0
    %16 = vsyncpa [#allocation9], 0
    %17 = vsyncpa [#allocation4], 0
    // Predicated region
    $region2: #{tpu_custom_call.1} parent=1 // pred_check
      _
    $region3: #{tpu_custom_call.1} parent=1 // pred_check_branch
      %19 = sbr.rel (0) target = $region5
    $region4: #{tpu_custom_call.1} parent=1 // pred_region
      %s21 = ssub.s32 1024, 1024
      %22 = vsyncadd [#allocation3], %s21
      %s23 = sshll.u32 [#allocation2], 4
      %s24 = int_to_ptr.vmem [resolvable:$true] %s23
      %29 = dma.hbm_to_vmem [thread:$0]  %s0, 1024, %s24, [#allocation3], 128, 128, 8
    $region5: #{tpu_custom_call.1} parent=1 // pred_fallthru
      _
    // Predicated region
    $region6: #{tpu_custom_call.1} parent=1 // pred_check
      _
    $region7: #{tpu_custom_call.1} parent=1 // pred_check_branch
      %31 = sbr.rel (0) target = $region9
    $region8: #{tpu_custom_call.1} parent=1 // pred_region
      _
    $region9: #{tpu_custom_call.1} parent=1 // pred_fallthru
      _
    // Predicated region
    $region10: #{tpu_custom_call.1} parent=1 // pred_check
      _
    $region11: #{tpu_custom_call.1} parent=1 // pred_check_branch
      %33 = sbr.rel (0) target = $region13
    $region12: #{tpu_custom_call.1} parent=1 // pred_region
      %s35 = ssub.s32 6144, 6144
      %36 = vsyncadd [#allocation6], %s35
      %s37 = sshll.u32 [#allocation5], 4
      %s38 = int_to_ptr.vmem [resolvable:$true] %s37
      %43 = dma.hbm_to_vmem [thread:$0]  %s2, 6144, %s38, [#allocation6], 384, 384, 24
    $region13: #{tpu_custom_call.1} parent=1 // pred_fallthru
      _
    // Predicated region
    $region14: #{tpu_custom_call.1} parent=1 // pred_check
      _
    $region15: #{tpu_custom_call.1} parent=1 // pred_check_branch
      %45 = sbr.rel (0) target = $region17
    $region16: #{tpu_custom_call.1} parent=1 // pred_region
      %s47 = ssub.s32 6144, 6144
      %48 = vsyncadd [#allocation6], %s47
      %s49 = sshll.u32 [#allocation7], 4
      %s50 = int_to_ptr.vmem [resolvable:$true] %s49
      %55 = dma.hbm_to_vmem [thread:$0]  %s3, 6144, %s50, [#allocation6], 384, 384, 24
    $region17: #{tpu_custom_call.1} parent=1 // pred_fallthru
      _
    // Predicated region
    $region18: #{tpu_custom_call.1} parent=1 // pred_check
      _
    $region19: #{tpu_custom_call.1} parent=1 // pred_check_branch
      %57 = sbr.rel (0) target = $region21
    $region20: #{tpu_custom_call.1} parent=1 // pred_region
      _
    $region21: #{tpu_custom_call.1} parent=1 // pred_fallthru
      _
    // Predicated region
    $region22: #{tpu_custom_call.1} parent=1 // pred_check
      _
    $region23: #{tpu_custom_call.1} parent=1 // pred_check_branch
      %59 = sbr.rel (0) target = $region25
    $region24: #{tpu_custom_call.1} parent=1 // pred_region
      _
    $region25: #{tpu_custom_call.1} parent=1 // pred_fallthru
      _
    // Predicated region
    $region26: #{tpu_custom_call.1} parent=1 // pred_check
      _
    $region27: #{tpu_custom_call.1} parent=1 // pred_check_branch
      %61 = sbr.rel (0) target = $region29
    $region28: #{tpu_custom_call.1} parent=1 // pred_region
      %s63 = ssub.s32 4096, 4096
      %64 = vsyncadd [#allocation9], %s63
      %s65 = sshll.u32 [#allocation8], 4
      %s66 = int_to_ptr.vmem [resolvable:$true] %s65
      %71 = dma.hbm_to_vmem [thread:$0]  %s6, 4096, %s66, [#allocation9], 256, 256, 16
    $region29: #{tpu_custom_call.1} parent=1 // pred_fallthru
      _
    // Predicated region
    $region30: #{tpu_custom_call.1} parent=1 // pred_check
      _
    $region31: #{tpu_custom_call.1} parent=1 // pred_check_branch
      %73 = sbr.rel (0) target = $region33
    $region32: #{tpu_custom_call.1} parent=1 // pred_region
      _
    $region33: #{tpu_custom_call.1} parent=1 // pred_fallthru
      _
    // Predicated region
    $region34: #{tpu_custom_call.1} parent=1 // pred_check
      _
    $region35: #{tpu_custom_call.1} parent=1 // pred_check_branch
      %75 = sbr.rel (0) target = $region37
    $region36: #{tpu_custom_call.1} parent=1 // pred_region
      _
    $region37: #{tpu_custom_call.1} parent=1 // pred_fallthru
      _
    // Predicated region
    $region38: #{tpu_custom_call.1} parent=1 // pred_check
      _
    $region39: #{tpu_custom_call.1} parent=1 // pred_check_branch
      %77 = sbr.rel (0) target = $region41
    $region40: #{tpu_custom_call.1} parent=1 // pred_region
      %78 = dma.done [#allocation3], 1024
    $region41: #{tpu_custom_call.1} parent=1 // pred_fallthru
      _
    // Predicated region
    $region42: #{tpu_custom_call.1} parent=1 // pred_check
      _
    $region43: #{tpu_custom_call.1} parent=1 // pred_check_branch
      %80 = sbr.rel (0) target = $region45
    $region44: #{tpu_custom_call.1} parent=1 // pred_region
      %81 = dma.done [#allocation6], 6144
    $region45: #{tpu_custom_call.1} parent=1 // pred_fallthru
      _
    // Predicated region
    $region46: #{tpu_custom_call.1} parent=1 // pred_check
      _
    $region47: #{tpu_custom_call.1} parent=1 // pred_check_branch
      %83 = sbr.rel (0) target = $region49
    $region48: #{tpu_custom_call.1} parent=1 // pred_region
      %84 = dma.done [#allocation6], 6144
    $region49: #{tpu_custom_call.1} parent=1 // pred_fallthru
      _
    // Predicated region
    $region50: #{tpu_custom_call.1} parent=1 // pred_check
      _
    $region51: #{tpu_custom_call.1} parent=1 // pred_check_branch
      %86 = sbr.rel (0) target = $region53
    $region52: #{tpu_custom_call.1} parent=1 // pred_region
      %87 = dma.done [#allocation9], 4096
    $region53: #{tpu_custom_call.1} parent=1 // pred_fallthru
      _
    %v88 = vld [vmem:[#allocation2] sm:$0xff]
    %v89 = vld [vmem:[#allocation2 + $0x8] sm:$0xff]
    %v90 = vld [vmem:[#allocation2 + $0x10] sm:$0xff]
    %v91 = vld [vmem:[#allocation2 + $0x18] sm:$0xff]
    %v92 = vld [vmem:[#allocation2 + $0x20] sm:$0xff]
    %v93 = vld [vmem:[#allocation2 + $0x28] sm:$0xff]
    %v94 = vld [vmem:[#allocation2 + $0x30] sm:$0xff]
    %v95 = vld [vmem:[#allocation2 + $0x38] sm:$0xff]
    %v96 = vld [vmem:[#allocation5] sm:$0xff]
    %v97 = vld [vmem:[#allocation5 + $0x8] sm:$0xff]
    %v98 = vld [vmem:[#allocation5 + $0x10] sm:$0xff]
    %v99 = vld [vmem:[#allocation5 + $0x18] sm:$0xff]
    %v100 = vld [vmem:[#allocation5 + $0x20] sm:$0xff]
    %v101 = vld [vmem:[#allocation5 + $0x28] sm:$0xff]
    %v102 = vld [vmem:[#allocation5 + $0x30] sm:$0xff]
    %v103 = vld [vmem:[#allocation5 + $0x38] sm:$0xff]
    %v104 = vld [vmem:[#allocation5 + $0x40] sm:$0xff]
    %v105 = vld [vmem:[#allocation5 + $0x48] sm:$0xff]
    %v106 = vld [vmem:[#allocation5 + $0x50] sm:$0xff]
    %v107 = vld [vmem:[#allocation5 + $0x58] sm:$0xff]
    %v108 = vld [vmem:[#allocation5 + $0x60] sm:$0xff]
    %v109 = vld [vmem:[#allocation5 + $0x68] sm:$0xff]
    %v110 = vld [vmem:[#allocation5 + $0x70] sm:$0xff]
    %v111 = vld [vmem:[#allocation5 + $0x78] sm:$0xff]
    %v112 = vld [vmem:[#allocation5 + $0x80] sm:$0xff]
    %v113 = vld [vmem:[#allocation5 + $0x88] sm:$0xff]
    %v114 = vld [vmem:[#allocation5 + $0x90] sm:$0xff]
    %v115 = vld [vmem:[#allocation5 + $0x98] sm:$0xff]
    %v116 = vld [vmem:[#allocation5 + $0xa0] sm:$0xff]
    %v117 = vld [vmem:[#allocation5 + $0xa8] sm:$0xff]
    %v118 = vld [vmem:[#allocation5 + $0xb0] sm:$0xff]
    %v119 = vld [vmem:[#allocation5 + $0xb8] sm:$0xff]
    %v120 = vld [vmem:[#allocation5 + $0xc0] sm:$0xff]
    %v121 = vld [vmem:[#allocation5 + $0xc8] sm:$0xff]
    %v122 = vld [vmem:[#allocation5 + $0xd0] sm:$0xff]
    %v123 = vld [vmem:[#allocation5 + $0xd8] sm:$0xff]
    %v124 = vld [vmem:[#allocation5 + $0xe0] sm:$0xff]
    %v125 = vld [vmem:[#allocation5 + $0xe8] sm:$0xff]
    %v126 = vld [vmem:[#allocation5 + $0xf0] sm:$0xff]
    %v127 = vld [vmem:[#allocation5 + $0xf8] sm:$0xff]
    %v128 = vld [vmem:[#allocation5 + $0x100] sm:$0xff]
    %v129 = vld [vmem:[#allocation5 + $0x108] sm:$0xff]
    %v130 = vld [vmem:[#allocation5 + $0x110] sm:$0xff]
    %v131 = vld [vmem:[#allocation5 + $0x118] sm:$0xff]
    %v132 = vld [vmem:[#allocation5 + $0x120] sm:$0xff]
    %v133 = vld [vmem:[#allocation5 + $0x128] sm:$0xff]
    %v134 = vld [vmem:[#allocation5 + $0x130] sm:$0xff]
    %v135 = vld [vmem:[#allocation5 + $0x138] sm:$0xff]
    %v136 = vld [vmem:[#allocation5 + $0x140] sm:$0xff]
    %v137 = vld [vmem:[#allocation5 + $0x148] sm:$0xff]
    %v138 = vld [vmem:[#allocation5 + $0x150] sm:$0xff]
    %v139 = vld [vmem:[#allocation5 + $0x158] sm:$0xff]
    %v140 = vld [vmem:[#allocation5 + $0x160] sm:$0xff]
    %v141 = vld [vmem:[#allocation5 + $0x168] sm:$0xff]
    %v142 = vld [vmem:[#allocation5 + $0x170] sm:$0xff]
    %v143 = vld [vmem:[#allocation5 + $0x178] sm:$0xff]
    %v144 = vld [vmem:[%s4] sm:$0x7]
    %v146 = vlaneseq
    %v147 = vshrl.u32 %v146, 7
    %v148 = vsub.s32 0, %v147
    %v149 = vrot.slane %v144, %v148
    %v150 = vlaneseq
    %v151 = vshrl.u32 %v150, 7
    %v152 = vsub.s32 1, %v151
    %v153 = vrot.slane %v144, %v152
    %v154 = vlaneseq
    %v155 = vshrl.u32 %v154, 7
    %v156 = vsub.s32 2, %v155
    %v157 = vrot.slane %v144, %v156
    %161 = vmatprep.subr.mxu0 %v142
    %162 = vmatpush1.msra.mxu0 %v141
    %163 = vmatprep.subr.mxu0 %v139
    %164 = vmatpush1.msra.mxu0 %v138
    %165 = vmatprep.subr.mxu0 %v136
    %166 = vmatpush1.msra.mxu0 %v135
    %167 = vmatprep.subr.mxu0 %v133
    %168 = vmatpush1.msra.mxu0 %v132
    %169 = vmatprep.subr.mxu0 %v130
    %170 = vmatpush1.msra.mxu0 %v129
    %171 = vmatprep.subr.mxu0 %v127
    %172 = vmatpush1.msra.mxu0 %v126
    %173 = vmatprep.subr.mxu0 %v124
    %174 = vmatpush1.msra.mxu0 %v123
    %175 = vmatprep.subr.mxu0 %v121
    %176 = vmatpush1.msra.mxu0 %v120
    %177 = vmatprep.subr.mxu0 %v118
    %178 = vmatpush1.msra.mxu0 %v117
    %179 = vmatprep.subr.mxu0 %v115
    %180 = vmatpush1.msra.mxu0 %v114
    %181 = vmatprep.subr.mxu0 %v112
    %182 = vmatpush1.msra.mxu0 %v111
    %183 = vmatprep.subr.mxu0 %v109
    %184 = vmatpush1.msra.mxu0 %v108
    %185 = vmatprep.subr.mxu0 %v106
    %186 = vmatpush1.msra.mxu0 %v105
    %187 = vmatprep.subr.mxu0 %v103
    %188 = vmatpush1.msra.mxu0 %v102
    %189 = vmatprep.subr.mxu0 %v100
    %190 = vmatpush1.msra.mxu0 %v99
    %191 = vmatprep.subr.mxu0 %v97
    %192 = vmatpush1.msra.mxu0 %v96
    %193 = vmatprep.subr.mxu0 0.0
    %194 = vmatpush2.msra.mxu0 0.0
    %195 = vmatprep.subr.mxu0 0.0
    %196 = vmatpush2.msra.mxu0 0.0
    %197 = vmatprep.subr.mxu0 0.0
    %198 = vmatpush2.msra.mxu0 0.0
    %199 = vmatprep.subr.mxu0 0.0
    %200 = vmatpush2.msra.mxu0 0.0
    %201 = vmatprep.subr.mxu0 0.0
    %202 = vmatpush2.msra.mxu0 0.0
    %203 = vmatprep.subr.mxu0 0.0
    %204 = vmatpush2.msra.mxu0 0.0
    %205 = vmatprep.subr.mxu0 0.0
    %206 = vmatpush2.msra.mxu0 0.0
    %207 = vmatprep.subr.mxu0 0.0
    %208 = vmatpush2.msra.mxu0 0.0
    %209 = vmatprep.subr.mxu0 0.0
    %210 = vmatpush2.msra.mxu0 0.0
    %211 = vmatprep.subr.mxu0 0.0
    %212 = vmatpush2.msra.mxu0 0.0
    %213 = vmatprep.subr.mxu0 0.0
    %214 = vmatpush2.msra.mxu0 0.0
    %215 = vmatprep.subr.mxu0 0.0
    %216 = vmatpush2.msra.mxu0 0.0
    %217 = vmatprep.subr.mxu0 0.0
    %218 = vmatpush2.msra.mxu0 0.0
    %219 = vmatprep.subr.mxu0 0.0
    %220 = vmatpush2.msra.mxu0 0.0
    %221 = vmatprep.subr.mxu0 0.0
    %222 = vmatpush2.msra.mxu0 0.0
    %223 = vmatprep.subr.mxu0 0.0
    %224 = vmatpush2.msra.mxu0 0.0
    %225 = vmatprep.mubr.f32.mxu0 0.0
    %226 = vmatmul.mubr.f32.gmra.mxu0 %v88
    %v227 = vpop.f32.mrf.mxu0
    %v228 = vadd.f32 %v149, %v227
    %v229 = vpop.f32.mrf.mxu0
    %v230 = vadd.f32 %v153, %v229
    %231 = vmatprep.mubr.f32.mxu0 0.0
    %232 = vmatmul.mubr.f32.gmra.mxu0 %v89
    %v233 = vpop.f32.mrf.mxu0
    %v234 = vadd.f32 %v149, %v233
    %v235 = vpop.f32.mrf.mxu0
    %v236 = vadd.f32 %v153, %v235
    %237 = vmatprep.mubr.f32.mxu0 0.0
    %238 = vmatmul.mubr.f32.gmra.mxu0 %v90
    %v239 = vpop.f32.mrf.mxu0
    %v240 = vadd.f32 %v149, %v239
    %v241 = vpop.f32.mrf.mxu0
    %v242 = vadd.f32 %v153, %v241
    %243 = vmatprep.mubr.f32.mxu0 0.0
    %244 = vmatmul.mubr.f32.gmra.mxu0 %v91
    %v245 = vpop.f32.mrf.mxu0
    %v246 = vadd.f32 %v149, %v245
    %v247 = vpop.f32.mrf.mxu0
    %v248 = vadd.f32 %v153, %v247
    %249 = vmatprep.mubr.f32.mxu0 0.0
    %250 = vmatmul.mubr.f32.gmra.mxu0 %v92
    %v251 = vpop.f32.mrf.mxu0
    %v252 = vadd.f32 %v149, %v251
    %v253 = vpop.f32.mrf.mxu0
    %v254 = vadd.f32 %v153, %v253
    %255 = vmatprep.mubr.f32.mxu0 0.0
    %256 = vmatmul.mubr.f32.gmra.mxu0 %v93
    %v257 = vpop.f32.mrf.mxu0
    %v258 = vadd.f32 %v149, %v257
    %v259 = vpop.f32.mrf.mxu0
    %v260 = vadd.f32 %v153, %v259
    %261 = vmatprep.mubr.f32.mxu0 0.0
    %262 = vmatmul.mubr.f32.gmra.mxu0 %v94
    %v263 = vpop.f32.mrf.mxu0
    %v264 = vadd.f32 %v149, %v263
    %v265 = vpop.f32.mrf.mxu0
    %v266 = vadd.f32 %v153, %v265
    %267 = vmatprep.mubr.f32.mxu0 0.0
    %268 = vmatmul.mubr.f32.gmra.mxu0 %v95
    %v269 = vpop.f32.mrf.mxu0
    %v270 = vadd.f32 %v149, %v269
    %v271 = vpop.f32.mrf.mxu0
    %v272 = vadd.f32 %v153, %v271
    %273 = vdwg.mxu0
    %274 = vmatprep.subr.mxu0 0.0
    %275 = vmatpush1.msra.mxu0 %v143
    %276 = vmatprep.subr.mxu0 0.0
    %277 = vmatpush1.msra.mxu0 %v140
    %278 = vmatprep.subr.mxu0 0.0
    %279 = vmatpush1.msra.mxu0 %v137
    %280 = vmatprep.subr.mxu0 0.0
    %281 = vmatpush1.msra.mxu0 %v134
    %282 = vmatprep.subr.mxu0 0.0
    %283 = vmatpush1.msra.mxu0 %v131
    %284 = vmatprep.subr.mxu0 0.0
    %285 = vmatpush1.msra.mxu0 %v128
    %286 = vmatprep.subr.mxu0 0.0
    %287 = vmatpush1.msra.mxu0 %v125
    %288 = vmatprep.subr.mxu0 0.0
    %289 = vmatpush1.msra.mxu0 %v122
    %290 = vmatprep.subr.mxu0 0.0
    %291 = vmatpush1.msra.mxu0 %v119
    %292 = vmatprep.subr.mxu0 0.0
    %293 = vmatpush1.msra.mxu0 %v116
    %294 = vmatprep.subr.mxu0 0.0
    %295 = vmatpush1.msra.mxu0 %v113
    %296 = vmatprep.subr.mxu0 0.0
    %297 = vmatpush1.msra.mxu0 %v110
    %298 = vmatprep.subr.mxu0 0.0
    %299 = vmatpush1.msra.mxu0 %v107
    %300 = vmatprep.subr.mxu0 0.0
    %301 = vmatpush1.msra.mxu0 %v104
    %302 = vmatprep.subr.mxu0 0.0
    %303 = vmatpush1.msra.mxu0 %v101
    %304 = vmatprep.subr.mxu0 0.0
    %305 = vmatpush1.msra.mxu0 %v98
    %306 = vmatprep.subr.mxu0 0.0
    %307 = vmatpush2.msra.mxu0 0.0
    %308 = vmatprep.subr.mxu0 0.0
    %309 = vmatpush2.msra.mxu0 0.0
    %310 = vmatprep.subr.mxu0 0.0
    %311 = vmatpush2.msra.mxu0 0.0
    %312 = vmatprep.subr.mxu0 0.0
    %313 = vmatpush2.msra.mxu0 0.0
    %314 = vmatprep.subr.mxu0 0.0
    %315 = vmatpush2.msra.mxu0 0.0
    %316 = vmatprep.subr.mxu0 0.0
    %317 = vmatpush2.msra.mxu0 0.0
    %318 = vmatprep.subr.mxu0 0.0
    %319 = vmatpush2.msra.mxu0 0.0
    %320 = vmatprep.subr.mxu0 0.0
    %321 = vmatpush2.msra.mxu0 0.0
    %322 = vmatprep.subr.mxu0 0.0
    %323 = vmatpush2.msra.mxu0 0.0
    %324 = vmatprep.subr.mxu0 0.0
    %325 = vmatpush2.msra.mxu0 0.0
    %326 = vmatprep.subr.mxu0 0.0
    %327 = vmatpush2.msra.mxu0 0.0
    %328 = vmatprep.subr.mxu0 0.0
    %329 = vmatpush2.msra.mxu0 0.0
    %330 = vmatprep.subr.mxu0 0.0
    %331 = vmatpush2.msra.mxu0 0.0
    %332 = vmatprep.subr.mxu0 0.0
    %333 = vmatpush2.msra.mxu0 0.0
    %334 = vmatprep.subr.mxu0 0.0
    %335 = vmatpush2.msra.mxu0 0.0
    %336 = vmatprep.subr.mxu0 0.0
    %337 = vmatpush2.msra.mxu0 0.0
    %338 = vmatprep.mubr.f32.mxu0 0.0
    %339 = vmatmul.mubr.f32.gmra.mxu0 %v88
    %v340 = vpop.f32.mrf.mxu0
    %v341 = vadd.f32 %v157, %v340
    %v342 = vpop.f32.mrf.mxu0
    %343 = vmatprep.mubr.f32.mxu0 0.0
    %344 = vmatmul.mubr.f32.gmra.mxu0 %v89
    %v345 = vpop.f32.mrf.mxu0
    %v346 = vadd.f32 %v157, %v345
    %v347 = vpop.f32.mrf.mxu0
    %348 = vmatprep.mubr.f32.mxu0 0.0
    %349 = vmatmul.mubr.f32.gmra.mxu0 %v90
    %v350 = vpop.f32.mrf.mxu0
    %v351 = vadd.f32 %v157, %v350
    %v352 = vpop.f32.mrf.mxu0
    %353 = vmatprep.mubr.f32.mxu0 0.0
    %354 = vmatmul.mubr.f32.gmra.mxu0 %v91
    %v355 = vpop.f32.mrf.mxu0
    %v356 = vadd.f32 %v157, %v355
    %v357 = vpop.f32.mrf.mxu0
    %358 = vmatprep.mubr.f32.mxu0 0.0
    %359 = vmatmul.mubr.f32.gmra.mxu0 %v92
    %v360 = vpop.f32.mrf.mxu0
    %v361 = vadd.f32 %v157, %v360
    %v362 = vpop.f32.mrf.mxu0
    %363 = vmatprep.mubr.f32.mxu0 0.0
    %364 = vmatmul.mubr.f32.gmra.mxu0 %v93
    %v365 = vpop.f32.mrf.mxu0
    %v366 = vadd.f32 %v157, %v365
    %v367 = vpop.f32.mrf.mxu0
    %368 = vmatprep.mubr.f32.mxu0 0.0
    %369 = vmatmul.mubr.f32.gmra.mxu0 %v94
    %v370 = vpop.f32.mrf.mxu0
    %v371 = vadd.f32 %v157, %v370
    %v372 = vpop.f32.mrf.mxu0
    %373 = vmatprep.mubr.f32.mxu0 0.0
    %374 = vmatmul.mubr.f32.gmra.mxu0 %v95
    %v375 = vpop.f32.mrf.mxu0
    %v376 = vadd.f32 %v157, %v375
    %v377 = vpop.f32.mrf.mxu0
    %378 = vdwg.mxu0
    %v379 = vld [vmem:[#allocation7] sm:$0xff]
    %v380 = vld [vmem:[#allocation7 + $0x8] sm:$0xff]
    %v381 = vld [vmem:[#allocation7 + $0x10] sm:$0xff]
    %v382 = vld [vmem:[#allocation7 + $0x18] sm:$0xff]
    %v383 = vld [vmem:[#allocation7 + $0x20] sm:$0xff]
    %v384 = vld [vmem:[#allocation7 + $0x28] sm:$0xff]
    %v385 = vld [vmem:[#allocation7 + $0x30] sm:$0xff]
    %v386 = vld [vmem:[#allocation7 + $0x38] sm:$0xff]
    %v387 = vld [vmem:[#allocation7 + $0x40] sm:$0xff]
    %v388 = vld [vmem:[#allocation7 + $0x48] sm:$0xff]
    %v389 = vld [vmem:[#allocation7 + $0x50] sm:$0xff]
    %v390 = vld [vmem:[#allocation7 + $0x58] sm:$0xff]
    %v391 = vld [vmem:[#allocation7 + $0x60] sm:$0xff]
    %v392 = vld [vmem:[#allocation7 + $0x68] sm:$0xff]
    %v393 = vld [vmem:[#allocation7 + $0x70] sm:$0xff]
    %v394 = vld [vmem:[#allocation7 + $0x78] sm:$0xff]
    %v395 = vld [vmem:[#allocation7 + $0x80] sm:$0xff]
    %v396 = vld [vmem:[#allocation7 + $0x88] sm:$0xff]
    %v397 = vld [vmem:[#allocation7 + $0x90] sm:$0xff]
    %v398 = vld [vmem:[#allocation7 + $0x98] sm:$0xff]
    %v399 = vld [vmem:[#allocation7 + $0xa0] sm:$0xff]
    %v400 = vld [vmem:[#allocation7 + $0xa8] sm:$0xff]
    %v401 = vld [vmem:[#allocation7 + $0xb0] sm:$0xff]
    %v402 = vld [vmem:[#allocation7 + $0xb8] sm:$0xff]
    %v403 = vld [vmem:[#allocation7 + $0xc0] sm:$0xff]
    %v404 = vld [vmem:[#allocation7 + $0xc8] sm:$0xff]
    %v405 = vld [vmem:[#allocation7 + $0xd0] sm:$0xff]
    %v406 = vld [vmem:[#allocation7 + $0xd8] sm:$0xff]
    %v407 = vld [vmem:[#allocation7 + $0xe0] sm:$0xff]
    %v408 = vld [vmem:[#allocation7 + $0xe8] sm:$0xff]
    %v409 = vld [vmem:[#allocation7 + $0xf0] sm:$0xff]
    %v410 = vld [vmem:[#allocation7 + $0xf8] sm:$0xff]
    %v411 = vld [vmem:[#allocation7 + $0x100] sm:$0xff]
    %v412 = vld [vmem:[#allocation7 + $0x108] sm:$0xff]
    %v413 = vld [vmem:[#allocation7 + $0x110] sm:$0xff]
    %v414 = vld [vmem:[#allocation7 + $0x118] sm:$0xff]
    %v415 = vld [vmem:[#allocation7 + $0x120] sm:$0xff]
    %v416 = vld [vmem:[#allocation7 + $0x128] sm:$0xff]
    %v417 = vld [vmem:[#allocation7 + $0x130] sm:$0xff]
    %v418 = vld [vmem:[#allocation7 + $0x138] sm:$0xff]
    %v419 = vld [vmem:[#allocation7 + $0x140] sm:$0xff]
    %v420 = vld [vmem:[#allocation7 + $0x148] sm:$0xff]
    %v421 = vld [vmem:[#allocation7 + $0x150] sm:$0xff]
    %v422 = vld [vmem:[#allocation7 + $0x158] sm:$0xff]
    %v423 = vld [vmem:[#allocation7 + $0x160] sm:$0xff]
    %v424 = vld [vmem:[#allocation7 + $0x168] sm:$0xff]
    %v425 = vld [vmem:[#allocation7 + $0x170] sm:$0xff]
    %v426 = vld [vmem:[#allocation7 + $0x178] sm:$0xff]
    %v427 = vld [vmem:[%s5] sm:$0x7]
    %v429 = vlaneseq
    %v430 = vshrl.u32 %v429, 7
    %v431 = vsub.s32 0, %v430
    %v432 = vrot.slane %v427, %v431
    %v433 = vlaneseq
    %v434 = vshrl.u32 %v433, 7
    %v435 = vsub.s32 1, %v434
    %v436 = vrot.slane %v427, %v435
    %v437 = vlaneseq
    %v438 = vshrl.u32 %v437, 7
    %v439 = vsub.s32 2, %v438
    %v440 = vrot.slane %v427, %v439
    %v444 = vld [vmem:[%s1] sm:$0xff]
    %445 = vmatprep.subr.mxu0 %v425
    %446 = vmatpush1.msra.mxu0 %v424
    %447 = vmatprep.subr.mxu0 %v422
    %448 = vmatpush1.msra.mxu0 %v421
    %449 = vmatprep.subr.mxu0 %v419
    %450 = vmatpush1.msra.mxu0 %v418
    %451 = vmatprep.subr.mxu0 %v416
    %452 = vmatpush1.msra.mxu0 %v415
    %453 = vmatprep.subr.mxu0 %v413
    %454 = vmatpush1.msra.mxu0 %v412
    %455 = vmatprep.subr.mxu0 %v410
    %456 = vmatpush1.msra.mxu0 %v409
    %457 = vmatprep.subr.mxu0 %v407
    %458 = vmatpush1.msra.mxu0 %v406
    %459 = vmatprep.subr.mxu0 %v404
    %460 = vmatpush1.msra.mxu0 %v403
    %461 = vmatprep.subr.mxu0 %v401
    %462 = vmatpush1.msra.mxu0 %v400
    %463 = vmatprep.subr.mxu0 %v398
    %464 = vmatpush1.msra.mxu0 %v397
    %465 = vmatprep.subr.mxu0 %v395
    %466 = vmatpush1.msra.mxu0 %v394
    %467 = vmatprep.subr.mxu0 %v392
    %468 = vmatpush1.msra.mxu0 %v391
    %469 = vmatprep.subr.mxu0 %v389
    %470 = vmatpush1.msra.mxu0 %v388
    %471 = vmatprep.subr.mxu0 %v386
    %472 = vmatpush1.msra.mxu0 %v385
    %473 = vmatprep.subr.mxu0 %v383
    %474 = vmatpush1.msra.mxu0 %v382
    %475 = vmatprep.subr.mxu0 %v380
    %476 = vmatpush1.msra.mxu0 %v379
    %477 = vmatprep.subr.mxu0 0.0
    %478 = vmatpush2.msra.mxu0 0.0
    %479 = vmatprep.subr.mxu0 0.0
    %480 = vmatpush2.msra.mxu0 0.0
    %481 = vmatprep.subr.mxu0 0.0
    %482 = vmatpush2.msra.mxu0 0.0
    %483 = vmatprep.subr.mxu0 0.0
    %484 = vmatpush2.msra.mxu0 0.0
    %485 = vmatprep.subr.mxu0 0.0
    %486 = vmatpush2.msra.mxu0 0.0
    %487 = vmatprep.subr.mxu0 0.0
    %488 = vmatpush2.msra.mxu0 0.0
    %489 = vmatprep.subr.mxu0 0.0
    %490 = vmatpush2.msra.mxu0 0.0
    %491 = vmatprep.subr.mxu0 0.0
    %492 = vmatpush2.msra.mxu0 0.0
    %493 = vmatprep.subr.mxu0 0.0
    %494 = vmatpush2.msra.mxu0 0.0
    %495 = vmatprep.subr.mxu0 0.0
    %496 = vmatpush2.msra.mxu0 0.0
    %497 = vmatprep.subr.mxu0 0.0
    %498 = vmatpush2.msra.mxu0 0.0
    %499 = vmatprep.subr.mxu0 0.0
    %500 = vmatpush2.msra.mxu0 0.0
    %501 = vmatprep.subr.mxu0 0.0
    %502 = vmatpush2.msra.mxu0 0.0
    %503 = vmatprep.subr.mxu0 0.0
    %504 = vmatpush2.msra.mxu0 0.0
    %505 = vmatprep.subr.mxu0 0.0
    %506 = vmatpush2.msra.mxu0 0.0
    %507 = vmatprep.subr.mxu0 0.0
    %508 = vmatpush2.msra.mxu0 0.0
    %509 = vmatprep.mubr.f32.mxu0 0.0
    %510 = vmatmul.mubr.f32.gmra.mxu0 0.0
    %v511 = vpop.f32.mrf.mxu0
    %v512 = vadd.f32 %v432, %v511
    %v513 = vpop.f32.mrf.mxu0
    %v514 = vadd.f32 %v436, %v513
    %515 = vdwg.mxu0
    %516 = vmatprep.subr.mxu0 0.0
    %517 = vmatpush1.msra.mxu0 %v426
    %518 = vmatprep.subr.mxu0 0.0
    %519 = vmatpush1.msra.mxu0 %v423
    %520 = vmatprep.subr.mxu0 0.0
    %521 = vmatpush1.msra.mxu0 %v420
    %522 = vmatprep.subr.mxu0 0.0
    %523 = vmatpush1.msra.mxu0 %v417
    %524 = vmatprep.subr.mxu0 0.0
    %525 = vmatpush1.msra.mxu0 %v414
    %526 = vmatprep.subr.mxu0 0.0
    %527 = vmatpush1.msra.mxu0 %v411
    %528 = vmatprep.subr.mxu0 0.0
    %529 = vmatpush1.msra.mxu0 %v408
    %530 = vmatprep.subr.mxu0 0.0
    %531 = vmatpush1.msra.mxu0 %v405
    %532 = vmatprep.subr.mxu0 0.0
    %533 = vmatpush1.msra.mxu0 %v402
    %534 = vmatprep.subr.mxu0 0.0
    %535 = vmatpush1.msra.mxu0 %v399
    %536 = vmatprep.subr.mxu0 0.0
    %537 = vmatpush1.msra.mxu0 %v396
    %538 = vmatprep.subr.mxu0 0.0
    %539 = vmatpush1.msra.mxu0 %v393
    %540 = vmatprep.subr.mxu0 0.0
    %541 = vmatpush1.msra.mxu0 %v390
    %542 = vmatprep.subr.mxu0 0.0
    %543 = vmatpush1.msra.mxu0 %v387
    %544 = vmatprep.subr.mxu0 0.0
    %545 = vmatpush1.msra.mxu0 %v384
    %546 = vmatprep.subr.mxu0 0.0
    %547 = vmatpush1.msra.mxu0 %v381
    %548 = vmatprep.subr.mxu0 0.0
    %549 = vmatpush2.msra.mxu0 0.0
    %550 = vmatprep.subr.mxu0 0.0
    %551 = vmatpush2.msra.mxu0 0.0
    %552 = vmatprep.subr.mxu0 0.0
    %553 = vmatpush2.msra.mxu0 0.0
    %554 = vmatprep.subr.mxu0 0.0
    %555 = vmatpush2.msra.mxu0 0.0
    %556 = vmatprep.subr.mxu0 0.0
    %557 = vmatpush2.msra.mxu0 0.0
    %558 = vmatprep.subr.mxu0 0.0
    %559 = vmatpush2.msra.mxu0 0.0
    %560 = vmatprep.subr.mxu0 0.0
    %561 = vmatpush2.msra.mxu0 0.0
    %562 = vmatprep.subr.mxu0 0.0
    %563 = vmatpush2.msra.mxu0 0.0
    %564 = vmatprep.subr.mxu0 0.0
    %565 = vmatpush2.msra.mxu0 0.0
    %566 = vmatprep.subr.mxu0 0.0
    %567 = vmatpush2.msra.mxu0 0.0
    %568 = vmatprep.subr.mxu0 0.0
    %569 = vmatpush2.msra.mxu0 0.0
    %570 = vmatprep.subr.mxu0 0.0
    %571 = vmatpush2.msra.mxu0 0.0
    %572 = vmatprep.subr.mxu0 0.0
    %573 = vmatpush2.msra.mxu0 0.0
    %574 = vmatprep.subr.mxu0 0.0
    %575 = vmatpush2.msra.mxu0 0.0
    %576 = vmatprep.subr.mxu0 0.0
    %577 = vmatpush2.msra.mxu0 0.0
    %578 = vmatprep.subr.mxu0 0.0
    %579 = vmatpush2.msra.mxu0 0.0
    %580 = vmatprep.mubr.f32.mxu0 0.0
    %581 = vmatmul.mubr.f32.gmra.mxu0 0.0
    %v582 = vpop.f32.mrf.mxu0
    %v583 = vadd.f32 %v440, %v582
    %v584 = vpop.f32.mrf.mxu0
    %585 = vdwg.mxu0
    %v586 = vadd.f32 %v228, %v512
    %v587 = vxor.u32 %v586, 2147483648
    %v588 = vmul.f32 %v587, 1.442695
    %v589 = vpow.pop %v588
    %v590 = vadd.f32 %v589, 1.0
    %v591 = vrcp.pop %v590
    %v592 = vmul.f32 1.0, %v591
    %v593 = vadd.f32 %v230, %v514
    %v594 = vxor.u32 %v593, 2147483648
    %v595 = vmul.f32 %v594, 1.442695
    %v596 = vpow.pop %v595
    %v597 = vadd.f32 %v596, 1.0
    %v598 = vrcp.pop %v597
    %v599 = vmul.f32 1.0, %v598
    %v600 = vmul.f32 %v592, %v583
    %v601 = vadd.f32 %v341, %v600
    %v602 = vtanh.pop %v601
    %v603 = vsub.f32 1.0, %v599
    %v604 = vmul.f32 %v603, %v602
    %v605 = vmul.f32 %v599, 0.0
    %v606 = vadd.f32 %v604, %v605
    %vm607 = vcmp.gt.f32.partialorder %v444, 0.0
    %v608 = vsel %vm607, 1, 0
    %v609 = vcvt.s32.f32 %v608
    %611 = vset.pattern.permute.xlu0 0
    %612 = vperm.xlu0 %611, %v609
    %v613 = vpop.permute.xlu0 %612
    %v615 = vmul.f32 %v613, %v606
    %v616 = vsub.f32 1.0, %v609
    %618 = vset.pattern.permute.xlu0 0
    %619 = vperm.xlu0 %618, %v616
    %v620 = vpop.permute.xlu0 %619
    %v622 = vmul.f32 %v620, 0.0
    %v623 = vadd.f32 %v615, %v622
    %v624 = vmul.f32 %v613, %v623
    %v625 = vadd.f32 %v624, 0.0
    %626 = vmatprep.subr.mxu0 %v425
    %627 = vmatpush1.msra.mxu0 %v424
    %628 = vmatprep.subr.mxu0 %v422
    %629 = vmatpush1.msra.mxu0 %v421
    %630 = vmatprep.subr.mxu0 %v419
    %631 = vmatpush1.msra.mxu0 %v418
    %632 = vmatprep.subr.mxu0 %v416
    %633 = vmatpush1.msra.mxu0 %v415
    %634 = vmatprep.subr.mxu0 %v413
    %635 = vmatpush1.msra.mxu0 %v412
    %636 = vmatprep.subr.mxu0 %v410
    %637 = vmatpush1.msra.mxu0 %v409
    %638 = vmatprep.subr.mxu0 %v407
    %639 = vmatpush1.msra.mxu0 %v406
    %640 = vmatprep.subr.mxu0 %v404
    %641 = vmatpush1.msra.mxu0 %v403
    %642 = vmatprep.subr.mxu0 %v401
    %643 = vmatpush1.msra.mxu0 %v400
    %644 = vmatprep.subr.mxu0 %v398
    %645 = vmatpush1.msra.mxu0 %v397
    %646 = vmatprep.subr.mxu0 %v395
    %647 = vmatpush1.msra.mxu0 %v394
    %648 = vmatprep.subr.mxu0 %v392
    %649 = vmatpush1.msra.mxu0 %v391
    %650 = vmatprep.subr.mxu0 %v389
    %651 = vmatpush1.msra.mxu0 %v388
    %652 = vmatprep.subr.mxu0 %v386
    %653 = vmatpush1.msra.mxu0 %v385
    %654 = vmatprep.subr.mxu0 %v383
    %655 = vmatpush1.msra.mxu0 %v382
    %656 = vmatprep.subr.mxu0 %v380
    %657 = vmatpush1.msra.mxu0 %v379
    %658 = vmatprep.subr.mxu0 0.0
    %659 = vmatpush2.msra.mxu0 0.0
    %660 = vmatprep.subr.mxu0 0.0
    %661 = vmatpush2.msra.mxu0 0.0
    %662 = vmatprep.subr.mxu0 0.0
    %663 = vmatpush2.msra.mxu0 0.0
    %664 = vmatprep.subr.mxu0 0.0
    %665 = vmatpush2.msra.mxu0 0.0
    %666 = vmatprep.subr.mxu0 0.0
    %667 = vmatpush2.msra.mxu0 0.0
    %668 = vmatprep.subr.mxu0 0.0
    %669 = vmatpush2.msra.mxu0 0.0
    %670 = vmatprep.subr.mxu0 0.0
    %671 = vmatpush2.msra.mxu0 0.0
    %672 = vmatprep.subr.mxu0 0.0
    %673 = vmatpush2.msra.mxu0 0.0
    %674 = vmatprep.subr.mxu0 0.0
    %675 = vmatpush2.msra.mxu0 0.0
    %676 = vmatprep.subr.mxu0 0.0
    %677 = vmatpush2.msra.mxu0 0.0
    %678 = vmatprep.subr.mxu0 0.0
    %679 = vmatpush2.msra.mxu0 0.0
    %680 = vmatprep.subr.mxu0 0.0
    %681 = vmatpush2.msra.mxu0 0.0
    %682 = vmatprep.subr.mxu0 0.0
    %683 = vmatpush2.msra.mxu0 0.0
    %684 = vmatprep.subr.mxu0 0.0
    %685 = vmatpush2.msra.mxu0 0.0
    %686 = vmatprep.subr.mxu0 0.0
    %687 = vmatpush2.msra.mxu0 0.0
    %688 = vmatprep.subr.mxu0 0.0
    %689 = vmatpush2.msra.mxu0 0.0
    %690 = vmatprep.mubr.f32.mxu0 0.0
    %691 = vmatmul.mubr.f32.gmra.mxu0 %v623
    %v692 = vpop.f32.mrf.mxu0
    %v693 = vadd.f32 %v432, %v692
    %v694 = vpop.f32.mrf.mxu0
    %v695 = vadd.f32 %v436, %v694
    %696 = vdwg.mxu0
    %697 = vmatprep.subr.mxu0 0.0
    %698 = vmatpush1.msra.mxu0 %v426
    %699 = vmatprep.subr.mxu0 0.0
    %700 = vmatpush1.msra.mxu0 %v423
    %701 = vmatprep.subr.mxu0 0.0
    %702 = vmatpush1.msra.mxu0 %v420
    %703 = vmatprep.subr.mxu0 0.0
    %704 = vmatpush1.msra.mxu0 %v417
    %705 = vmatprep.subr.mxu0 0.0
    %706 = vmatpush1.msra.mxu0 %v414
    %707 = vmatprep.subr.mxu0 0.0
    %708 = vmatpush1.msra.mxu0 %v411
    %709 = vmatprep.subr.mxu0 0.0
    %710 = vmatpush1.msra.mxu0 %v408
    %711 = vmatprep.subr.mxu0 0.0
    %712 = vmatpush1.msra.mxu0 %v405
    %713 = vmatprep.subr.mxu0 0.0
    %714 = vmatpush1.msra.mxu0 %v402
    %715 = vmatprep.subr.mxu0 0.0
    %716 = vmatpush1.msra.mxu0 %v399
    %717 = vmatprep.subr.mxu0 0.0
    %718 = vmatpush1.msra.mxu0 %v396
    %719 = vmatprep.subr.mxu0 0.0
    %720 = vmatpush1.msra.mxu0 %v393
    %721 = vmatprep.subr.mxu0 0.0
    %722 = vmatpush1.msra.mxu0 %v390
    %723 = vmatprep.subr.mxu0 0.0
    %724 = vmatpush1.msra.mxu0 %v387
    %725 = vmatprep.subr.mxu0 0.0
    %726 = vmatpush1.msra.mxu0 %v384
    %727 = vmatprep.subr.mxu0 0.0
    %728 = vmatpush1.msra.mxu0 %v381
    %729 = vmatprep.subr.mxu0 0.0
    %730 = vmatpush2.msra.mxu0 0.0
    %731 = vmatprep.subr.mxu0 0.0
    %732 = vmatpush2.msra.mxu0 0.0
    %733 = vmatprep.subr.mxu0 0.0
    %734 = vmatpush2.msra.mxu0 0.0
    %735 = vmatprep.subr.mxu0 0.0
    %736 = vmatpush2.msra.mxu0 0.0
    %737 = vmatprep.subr.mxu0 0.0
    %738 = vmatpush2.msra.mxu0 0.0
    %739 = vmatprep.subr.mxu0 0.0
    %740 = vmatpush2.msra.mxu0 0.0
    %741 = vmatprep.subr.mxu0 0.0
    %742 = vmatpush2.msra.mxu0 0.0
    %743 = vmatprep.subr.mxu0 0.0
    %744 = vmatpush2.msra.mxu0 0.0
    %745 = vmatprep.subr.mxu0 0.0
    %746 = vmatpush2.msra.mxu0 0.0
    %747 = vmatprep.subr.mxu0 0.0
    %748 = vmatpush2.msra.mxu0 0.0
    %749 = vmatprep.subr.mxu0 0.0
    %750 = vmatpush2.msra.mxu0 0.0
    %751 = vmatprep.subr.mxu0 0.0
    %752 = vmatpush2.msra.mxu0 0.0
    %753 = vmatprep.subr.mxu0 0.0
    %754 = vmatpush2.msra.mxu0 0.0
    %755 = vmatprep.subr.mxu0 0.0
    %756 = vmatpush2.msra.mxu0 0.0
    %757 = vmatprep.subr.mxu0 0.0
    %758 = vmatpush2.msra.mxu0 0.0
    %759 = vmatprep.subr.mxu0 0.0
    %760 = vmatpush2.msra.mxu0 0.0
    %761 = vmatprep.mubr.f32.mxu0 0.0
    %762 = vmatmul.mubr.f32.gmra.mxu0 %v623
    %v763 = vpop.f32.mrf.mxu0
    %v764 = vadd.f32 %v440, %v763
    %v765 = vpop.f32.mrf.mxu0
    %766 = vdwg.mxu0
    %v767 = vadd.f32 %v234, %v693
    %v768 = vxor.u32 %v767, 2147483648
    %v769 = vmul.f32 %v768, 1.442695
    %v770 = vpow.pop %v769
    %v771 = vadd.f32 %v770, 1.0
    %v772 = vrcp.pop %v771
    %v773 = vmul.f32 1.0, %v772
    %v774 = vadd.f32 %v236, %v695
    %v775 = vxor.u32 %v774, 2147483648
    %v776 = vmul.f32 %v775, 1.442695
    %v777 = vpow.pop %v776
    %v778 = vadd.f32 %v777, 1.0
    %v779 = vrcp.pop %v778
    %v780 = vmul.f32 1.0, %v779
    %v781 = vmul.f32 %v773, %v764
    %v782 = vadd.f32 %v346, %v781
    %v783 = vtanh.pop %v782
    %v784 = vsub.f32 1.0, %v780
    %v785 = vmul.f32 %v784, %v783
    %v786 = vmul.f32 %v780, %v623
    %v787 = vadd.f32 %v785, %v786
    %vm788 = vcmp.gt.f32.partialorder %v444, 1.0
    %v789 = vsel %vm788, 1, 0
    %v790 = vcvt.s32.f32 %v789
    %792 = vset.pattern.permute.xlu0 0
    %793 = vperm.xlu0 %792, %v790
    %v794 = vpop.permute.xlu0 %793
    %v796 = vmul.f32 %v794, %v787
    %v797 = vsub.f32 1.0, %v790
    %799 = vset.pattern.permute.xlu0 0
    %800 = vperm.xlu0 %799, %v797
    %v801 = vpop.permute.xlu0 %800
    %v803 = vmul.f32 %v801, %v623
    %v804 = vadd.f32 %v796, %v803
    %v805 = vmul.f32 %v794, %v804
    %v806 = vadd.f32 %v625, %v805
    %807 = vmatprep.subr.mxu0 %v425
    %808 = vmatpush1.msra.mxu0 %v424
    %809 = vmatprep.subr.mxu0 %v422
    %810 = vmatpush1.msra.mxu0 %v421
    %811 = vmatprep.subr.mxu0 %v419
    %812 = vmatpush1.msra.mxu0 %v418
    %813 = vmatprep.subr.mxu0 %v416
    %814 = vmatpush1.msra.mxu0 %v415
    %815 = vmatprep.subr.mxu0 %v413
    %816 = vmatpush1.msra.mxu0 %v412
    %817 = vmatprep.subr.mxu0 %v410
    %818 = vmatpush1.msra.mxu0 %v409
    %819 = vmatprep.subr.mxu0 %v407
    %820 = vmatpush1.msra.mxu0 %v406
    %821 = vmatprep.subr.mxu0 %v404
    %822 = vmatpush1.msra.mxu0 %v403
    %823 = vmatprep.subr.mxu0 %v401
    %824 = vmatpush1.msra.mxu0 %v400
    %825 = vmatprep.subr.mxu0 %v398
    %826 = vmatpush1.msra.mxu0 %v397
    %827 = vmatprep.subr.mxu0 %v395
    %828 = vmatpush1.msra.mxu0 %v394
    %829 = vmatprep.subr.mxu0 %v392
    %830 = vmatpush1.msra.mxu0 %v391
    %831 = vmatprep.subr.mxu0 %v389
    %832 = vmatpush1.msra.mxu0 %v388
    %833 = vmatprep.subr.mxu0 %v386
    %834 = vmatpush1.msra.mxu0 %v385
    %835 = vmatprep.subr.mxu0 %v383
    %836 = vmatpush1.msra.mxu0 %v382
    %837 = vmatprep.subr.mxu0 %v380
    %838 = vmatpush1.msra.mxu0 %v379
    %839 = vmatprep.subr.mxu0 0.0
    %840 = vmatpush2.msra.mxu0 0.0
    %841 = vmatprep.subr.mxu0 0.0
    %842 = vmatpush2.msra.mxu0 0.0
    %843 = vmatprep.subr.mxu0 0.0
    %844 = vmatpush2.msra.mxu0 0.0
    %845 = vmatprep.subr.mxu0 0.0
    %846 = vmatpush2.msra.mxu0 0.0
    %847 = vmatprep.subr.mxu0 0.0
    %848 = vmatpush2.msra.mxu0 0.0
    %849 = vmatprep.subr.mxu0 0.0
    %850 = vmatpush2.msra.mxu0 0.0
    %851 = vmatprep.subr.mxu0 0.0
    %852 = vmatpush2.msra.mxu0 0.0
    %853 = vmatprep.subr.mxu0 0.0
    %854 = vmatpush2.msra.mxu0 0.0
    %855 = vmatprep.subr.mxu0 0.0
    %856 = vmatpush2.msra.mxu0 0.0
    %857 = vmatprep.subr.mxu0 0.0
    %858 = vmatpush2.msra.mxu0 0.0
    %859 = vmatprep.subr.mxu0 0.0
    %860 = vmatpush2.msra.mxu0 0.0
    %861 = vmatprep.subr.mxu0 0.0
    %862 = vmatpush2.msra.mxu0 0.0
    %863 = vmatprep.subr.mxu0 0.0
    %864 = vmatpush2.msra.mxu0 0.0
    %865 = vmatprep.subr.mxu0 0.0
    %866 = vmatpush2.msra.mxu0 0.0
    %867 = vmatprep.subr.mxu0 0.0
    %868 = vmatpush2.msra.mxu0 0.0
    %869 = vmatprep.subr.mxu0 0.0
    %870 = vmatpush2.msra.mxu0 0.0
    %871 = vmatprep.mubr.f32.mxu0 0.0
    %872 = vmatmul.mubr.f32.gmra.mxu0 %v804
    %v873 = vpop.f32.mrf.mxu0
    %v874 = vadd.f32 %v432, %v873
    %v875 = vpop.f32.mrf.mxu0
    %v876 = vadd.f32 %v436, %v875
    %877 = vdwg.mxu0
    %878 = vmatprep.subr.mxu0 0.0
    %879 = vmatpush1.msra.mxu0 %v426
    %880 = vmatprep.subr.mxu0 0.0
    %881 = vmatpush1.msra.mxu0 %v423
    %882 = vmatprep.subr.mxu0 0.0
    %883 = vmatpush1.msra.mxu0 %v420
    %884 = vmatprep.subr.mxu0 0.0
    %885 = vmatpush1.msra.mxu0 %v417
    %886 = vmatprep.subr.mxu0 0.0
    %887 = vmatpush1.msra.mxu0 %v414
    %888 = vmatprep.subr.mxu0 0.0
    %889 = vmatpush1.msra.mxu0 %v411
    %890 = vmatprep.subr.mxu0 0.0
    %891 = vmatpush1.msra.mxu0 %v408
    %892 = vmatprep.subr.mxu0 0.0
    %893 = vmatpush1.msra.mxu0 %v405
    %894 = vmatprep.subr.mxu0 0.0
    %895 = vmatpush1.msra.mxu0 %v402
    %896 = vmatprep.subr.mxu0 0.0
    %897 = vmatpush1.msra.mxu0 %v399
    %898 = vmatprep.subr.mxu0 0.0
    %899 = vmatpush1.msra.mxu0 %v396
    %900 = vmatprep.subr.mxu0 0.0
    %901 = vmatpush1.msra.mxu0 %v393
    %902 = vmatprep.subr.mxu0 0.0
    %903 = vmatpush1.msra.mxu0 %v390
    %904 = vmatprep.subr.mxu0 0.0
    %905 = vmatpush1.msra.mxu0 %v387
    %906 = vmatprep.subr.mxu0 0.0
    %907 = vmatpush1.msra.mxu0 %v384
    %908 = vmatprep.subr.mxu0 0.0
    %909 = vmatpush1.msra.mxu0 %v381
    %910 = vmatprep.subr.mxu0 0.0
    %911 = vmatpush2.msra.mxu0 0.0
    %912 = vmatprep.subr.mxu0 0.0
    %913 = vmatpush2.msra.mxu0 0.0
    %914 = vmatprep.subr.mxu0 0.0
    %915 = vmatpush2.msra.mxu0 0.0
    %916 = vmatprep.subr.mxu0 0.0
    %917 = vmatpush2.msra.mxu0 0.0
    %918 = vmatprep.subr.mxu0 0.0
    %919 = vmatpush2.msra.mxu0 0.0
    %920 = vmatprep.subr.mxu0 0.0
    %921 = vmatpush2.msra.mxu0 0.0
    %922 = vmatprep.subr.mxu0 0.0
    %923 = vmatpush2.msra.mxu0 0.0
    %924 = vmatprep.subr.mxu0 0.0
    %925 = vmatpush2.msra.mxu0 0.0
    %926 = vmatprep.subr.mxu0 0.0
    %927 = vmatpush2.msra.mxu0 0.0
    %928 = vmatprep.subr.mxu0 0.0
    %929 = vmatpush2.msra.mxu0 0.0
    %930 = vmatprep.subr.mxu0 0.0
    %931 = vmatpush2.msra.mxu0 0.0
    %932 = vmatprep.subr.mxu0 0.0
    %933 = vmatpush2.msra.mxu0 0.0
    %934 = vmatprep.subr.mxu0 0.0
    %935 = vmatpush2.msra.mxu0 0.0
    %936 = vmatprep.subr.mxu0 0.0
    %937 = vmatpush2.msra.mxu0 0.0
    %938 = vmatprep.subr.mxu0 0.0
    %939 = vmatpush2.msra.mxu0 0.0
    %940 = vmatprep.subr.mxu0 0.0
    %941 = vmatpush2.msra.mxu0 0.0
    %942 = vmatprep.mubr.f32.mxu0 0.0
    %943 = vmatmul.mubr.f32.gmra.mxu0 %v804
    %v944 = vpop.f32.mrf.mxu0
    %v945 = vadd.f32 %v440, %v944
    %v946 = vpop.f32.mrf.mxu0
    %947 = vdwg.mxu0
    %v948 = vadd.f32 %v240, %v874
    %v949 = vxor.u32 %v948, 2147483648
    %v950 = vmul.f32 %v949, 1.442695
    %v951 = vpow.pop %v950
    %v952 = vadd.f32 %v951, 1.0
    %v953 = vrcp.pop %v952
    %v954 = vmul.f32 1.0, %v953
    %v955 = vadd.f32 %v242, %v876
    %v956 = vxor.u32 %v955, 2147483648
    %v957 = vmul.f32 %v956, 1.442695
    %v958 = vpow.pop %v957
    %v959 = vadd.f32 %v958, 1.0
    %v960 = vrcp.pop %v959
    %v961 = vmul.f32 1.0, %v960
    %v962 = vmul.f32 %v954, %v945
    %v963 = vadd.f32 %v351, %v962
    %v964 = vtanh.pop %v963
    %v965 = vsub.f32 1.0, %v961
    %v966 = vmul.f32 %v965, %v964
    %v967 = vmul.f32 %v961, %v804
    %v968 = vadd.f32 %v966, %v967
    %vm969 = vcmp.gt.f32.partialorder %v444, 2.0
    %v970 = vsel %vm969, 1, 0
    %v971 = vcvt.s32.f32 %v970
    %973 = vset.pattern.permute.xlu0 0
    %974 = vperm.xlu0 %973, %v971
    %v975 = vpop.permute.xlu0 %974
    %v977 = vmul.f32 %v975, %v968
    %v978 = vsub.f32 1.0, %v971
    %980 = vset.pattern.permute.xlu0 0
    %981 = vperm.xlu0 %980, %v978
    %v982 = vpop.permute.xlu0 %981
    %v984 = vmul.f32 %v982, %v804
    %v985 = vadd.f32 %v977, %v984
    %v986 = vmul.f32 %v975, %v985
    %v987 = vadd.f32 %v806, %v986
    %988 = vmatprep.subr.mxu0 %v425
    %989 = vmatpush1.msra.mxu0 %v424
    %990 = vmatprep.subr.mxu0 %v422
    %991 = vmatpush1.msra.mxu0 %v421
    %992 = vmatprep.subr.mxu0 %v419
    %993 = vmatpush1.msra.mxu0 %v418
    %994 = vmatprep.subr.mxu0 %v416
    %995 = vmatpush1.msra.mxu0 %v415
    %996 = vmatprep.subr.mxu0 %v413
    %997 = vmatpush1.msra.mxu0 %v412
    %998 = vmatprep.subr.mxu0 %v410
    %999 = vmatpush1.msra.mxu0 %v409
    %1000 = vmatprep.subr.mxu0 %v407
    %1001 = vmatpush1.msra.mxu0 %v406
    %1002 = vmatprep.subr.mxu0 %v404
    %1003 = vmatpush1.msra.mxu0 %v403
    %1004 = vmatprep.subr.mxu0 %v401
    %1005 = vmatpush1.msra.mxu0 %v400
    %1006 = vmatprep.subr.mxu0 %v398
    %1007 = vmatpush1.msra.mxu0 %v397
    %1008 = vmatprep.subr.mxu0 %v395
    %1009 = vmatpush1.msra.mxu0 %v394
    %1010 = vmatprep.subr.mxu0 %v392
    %1011 = vmatpush1.msra.mxu0 %v391
    %1012 = vmatprep.subr.mxu0 %v389
    %1013 = vmatpush1.msra.mxu0 %v388
    %1014 = vmatprep.subr.mxu0 %v386
    %1015 = vmatpush1.msra.mxu0 %v385
    %1016 = vmatprep.subr.mxu0 %v383
    %1017 = vmatpush1.msra.mxu0 %v382
    %1018 = vmatprep.subr.mxu0 %v380
    %1019 = vmatpush1.msra.mxu0 %v379
    %1020 = vmatprep.subr.mxu0 0.0
    %1021 = vmatpush2.msra.mxu0 0.0
    %1022 = vmatprep.subr.mxu0 0.0
    %1023 = vmatpush2.msra.mxu0 0.0
    %1024 = vmatprep.subr.mxu0 0.0
    %1025 = vmatpush2.msra.mxu0 0.0
    %1026 = vmatprep.subr.mxu0 0.0
    %1027 = vmatpush2.msra.mxu0 0.0
    %1028 = vmatprep.subr.mxu0 0.0
    %1029 = vmatpush2.msra.mxu0 0.0
    %1030 = vmatprep.subr.mxu0 0.0
    %1031 = vmatpush2.msra.mxu0 0.0
    %1032 = vmatprep.subr.mxu0 0.0
    %1033 = vmatpush2.msra.mxu0 0.0
    %1034 = vmatprep.subr.mxu0 0.0
    %1035 = vmatpush2.msra.mxu0 0.0
    %1036 = vmatprep.subr.mxu0 0.0
    %1037 = vmatpush2.msra.mxu0 0.0
    %1038 = vmatprep.subr.mxu0 0.0
    %1039 = vmatpush2.msra.mxu0 0.0
    %1040 = vmatprep.subr.mxu0 0.0
    %1041 = vmatpush2.msra.mxu0 0.0
    %1042 = vmatprep.subr.mxu0 0.0
    %1043 = vmatpush2.msra.mxu0 0.0
    %1044 = vmatprep.subr.mxu0 0.0
    %1045 = vmatpush2.msra.mxu0 0.0
    %1046 = vmatprep.subr.mxu0 0.0
    %1047 = vmatpush2.msra.mxu0 0.0
    %1048 = vmatprep.subr.mxu0 0.0
    %1049 = vmatpush2.msra.mxu0 0.0
    %1050 = vmatprep.subr.mxu0 0.0
    %1051 = vmatpush2.msra.mxu0 0.0
    %1052 = vmatprep.mubr.f32.mxu0 0.0
    %1053 = vmatmul.mubr.f32.gmra.mxu0 %v985
    %v1054 = vpop.f32.mrf.mxu0
    %v1055 = vadd.f32 %v432, %v1054
    %v1056 = vpop.f32.mrf.mxu0
    %v1057 = vadd.f32 %v436, %v1056
    %1058 = vdwg.mxu0
    %1059 = vmatprep.subr.mxu0 0.0
    %1060 = vmatpush1.msra.mxu0 %v426
    %1061 = vmatprep.subr.mxu0 0.0
    %1062 = vmatpush1.msra.mxu0 %v423
    %1063 = vmatprep.subr.mxu0 0.0
    %1064 = vmatpush1.msra.mxu0 %v420
    %1065 = vmatprep.subr.mxu0 0.0
    %1066 = vmatpush1.msra.mxu0 %v417
    %1067 = vmatprep.subr.mxu0 0.0
    %1068 = vmatpush1.msra.mxu0 %v414
    %1069 = vmatprep.subr.mxu0 0.0
    %1070 = vmatpush1.msra.mxu0 %v411
    %1071 = vmatprep.subr.mxu0 0.0
    %1072 = vmatpush1.msra.mxu0 %v408
    %1073 = vmatprep.subr.mxu0 0.0
    %1074 = vmatpush1.msra.mxu0 %v405
    %1075 = vmatprep.subr.mxu0 0.0
    %1076 = vmatpush1.msra.mxu0 %v402
    %1077 = vmatprep.subr.mxu0 0.0
    %1078 = vmatpush1.msra.mxu0 %v399
    %1079 = vmatprep.subr.mxu0 0.0
    %1080 = vmatpush1.msra.mxu0 %v396
    %1081 = vmatprep.subr.mxu0 0.0
    %1082 = vmatpush1.msra.mxu0 %v393
    %1083 = vmatprep.subr.mxu0 0.0
    %1084 = vmatpush1.msra.mxu0 %v390
    %1085 = vmatprep.subr.mxu0 0.0
    %1086 = vmatpush1.msra.mxu0 %v387
    %1087 = vmatprep.subr.mxu0 0.0
    %1088 = vmatpush1.msra.mxu0 %v384
    %1089 = vmatprep.subr.mxu0 0.0
    %1090 = vmatpush1.msra.mxu0 %v381
    %1091 = vmatprep.subr.mxu0 0.0
    %1092 = vmatpush2.msra.mxu0 0.0
    %1093 = vmatprep.subr.mxu0 0.0
    %1094 = vmatpush2.msra.mxu0 0.0
    %1095 = vmatprep.subr.mxu0 0.0
    %1096 = vmatpush2.msra.mxu0 0.0
    %1097 = vmatprep.subr.mxu0 0.0
    %1098 = vmatpush2.msra.mxu0 0.0
    %1099 = vmatprep.subr.mxu0 0.0
    %1100 = vmatpush2.msra.mxu0 0.0
    %1101 = vmatprep.subr.mxu0 0.0
    %1102 = vmatpush2.msra.mxu0 0.0
    %1103 = vmatprep.subr.mxu0 0.0
    %1104 = vmatpush2.msra.mxu0 0.0
    %1105 = vmatprep.subr.mxu0 0.0
    %1106 = vmatpush2.msra.mxu0 0.0
    %1107 = vmatprep.subr.mxu0 0.0
    %1108 = vmatpush2.msra.mxu0 0.0
    %1109 = vmatprep.subr.mxu0 0.0
    %1110 = vmatpush2.msra.mxu0 0.0
    %1111 = vmatprep.subr.mxu0 0.0
    %1112 = vmatpush2.msra.mxu0 0.0
    %1113 = vmatprep.subr.mxu0 0.0
    %1114 = vmatpush2.msra.mxu0 0.0
    %1115 = vmatprep.subr.mxu0 0.0
    %1116 = vmatpush2.msra.mxu0 0.0
    %1117 = vmatprep.subr.mxu0 0.0
    %1118 = vmatpush2.msra.mxu0 0.0
    %1119 = vmatprep.subr.mxu0 0.0
    %1120 = vmatpush2.msra.mxu0 0.0
    %1121 = vmatprep.subr.mxu0 0.0
    %1122 = vmatpush2.msra.mxu0 0.0
    %1123 = vmatprep.mubr.f32.mxu0 0.0
    %1124 = vmatmul.mubr.f32.gmra.mxu0 %v985
    %v1125 = vpop.f32.mrf.mxu0
    %v1126 = vadd.f32 %v440, %v1125
    %v1127 = vpop.f32.mrf.mxu0
    %1128 = vdwg.mxu0
    %v1129 = vadd.f32 %v246, %v1055
    %v1130 = vxor.u32 %v1129, 2147483648
    %v1131 = vmul.f32 %v1130, 1.442695
    %v1132 = vpow.pop %v1131
    %v1133 = vadd.f32 %v1132, 1.0
    %v1134 = vrcp.pop %v1133
    %v1135 = vmul.f32 1.0, %v1134
    %v1136 = vadd.f32 %v248, %v1057
    %v1137 = vxor.u32 %v1136, 2147483648
    %v1138 = vmul.f32 %v1137, 1.442695
    %v1139 = vpow.pop %v1138
    %v1140 = vadd.f32 %v1139, 1.0
    %v1141 = vrcp.pop %v1140
    %v1142 = vmul.f32 1.0, %v1141
    %v1143 = vmul.f32 %v1135, %v1126
    %v1144 = vadd.f32 %v356, %v1143
    %v1145 = vtanh.pop %v1144
    %v1146 = vsub.f32 1.0, %v1142
    %v1147 = vmul.f32 %v1146, %v1145
    %v1148 = vmul.f32 %v1142, %v985
    %v1149 = vadd.f32 %v1147, %v1148
    %vm1150 = vcmp.gt.f32.partialorder %v444, 3.0
    %v1151 = vsel %vm1150, 1, 0
    %v1152 = vcvt.s32.f32 %v1151
    %1154 = vset.pattern.permute.xlu0 0
    %1155 = vperm.xlu0 %1154, %v1152
    %v1156 = vpop.permute.xlu0 %1155
    %v1158 = vmul.f32 %v1156, %v1149
    %v1159 = vsub.f32 1.0, %v1152
    %1161 = vset.pattern.permute.xlu0 0
    %1162 = vperm.xlu0 %1161, %v1159
    %v1163 = vpop.permute.xlu0 %1162
    %v1165 = vmul.f32 %v1163, %v985
    %v1166 = vadd.f32 %v1158, %v1165
    %v1167 = vmul.f32 %v1156, %v1166
    %v1168 = vadd.f32 %v987, %v1167
    %1169 = vmatprep.subr.mxu0 %v425
    %1170 = vmatpush1.msra.mxu0 %v424
    %1171 = vmatprep.subr.mxu0 %v422
    %1172 = vmatpush1.msra.mxu0 %v421
    %1173 = vmatprep.subr.mxu0 %v419
    %1174 = vmatpush1.msra.mxu0 %v418
    %1175 = vmatprep.subr.mxu0 %v416
    %1176 = vmatpush1.msra.mxu0 %v415
    %1177 = vmatprep.subr.mxu0 %v413
    %1178 = vmatpush1.msra.mxu0 %v412
    %1179 = vmatprep.subr.mxu0 %v410
    %1180 = vmatpush1.msra.mxu0 %v409
    %1181 = vmatprep.subr.mxu0 %v407
    %1182 = vmatpush1.msra.mxu0 %v406
    %1183 = vmatprep.subr.mxu0 %v404
    %1184 = vmatpush1.msra.mxu0 %v403
    %1185 = vmatprep.subr.mxu0 %v401
    %1186 = vmatpush1.msra.mxu0 %v400
    %1187 = vmatprep.subr.mxu0 %v398
    %1188 = vmatpush1.msra.mxu0 %v397
    %1189 = vmatprep.subr.mxu0 %v395
    %1190 = vmatpush1.msra.mxu0 %v394
    %1191 = vmatprep.subr.mxu0 %v392
    %1192 = vmatpush1.msra.mxu0 %v391
    %1193 = vmatprep.subr.mxu0 %v389
    %1194 = vmatpush1.msra.mxu0 %v388
    %1195 = vmatprep.subr.mxu0 %v386
    %1196 = vmatpush1.msra.mxu0 %v385
    %1197 = vmatprep.subr.mxu0 %v383
    %1198 = vmatpush1.msra.mxu0 %v382
    %1199 = vmatprep.subr.mxu0 %v380
    %1200 = vmatpush1.msra.mxu0 %v379
    %1201 = vmatprep.subr.mxu0 0.0
    %1202 = vmatpush2.msra.mxu0 0.0
    %1203 = vmatprep.subr.mxu0 0.0
    %1204 = vmatpush2.msra.mxu0 0.0
    %1205 = vmatprep.subr.mxu0 0.0
    %1206 = vmatpush2.msra.mxu0 0.0
    %1207 = vmatprep.subr.mxu0 0.0
    %1208 = vmatpush2.msra.mxu0 0.0
    %1209 = vmatprep.subr.mxu0 0.0
    %1210 = vmatpush2.msra.mxu0 0.0
    %1211 = vmatprep.subr.mxu0 0.0
    %1212 = vmatpush2.msra.mxu0 0.0
    %1213 = vmatprep.subr.mxu0 0.0
    %1214 = vmatpush2.msra.mxu0 0.0
    %1215 = vmatprep.subr.mxu0 0.0
    %1216 = vmatpush2.msra.mxu0 0.0
    %1217 = vmatprep.subr.mxu0 0.0
    %1218 = vmatpush2.msra.mxu0 0.0
    %1219 = vmatprep.subr.mxu0 0.0
    %1220 = vmatpush2.msra.mxu0 0.0
    %1221 = vmatprep.subr.mxu0 0.0
    %1222 = vmatpush2.msra.mxu0 0.0
    %1223 = vmatprep.subr.mxu0 0.0
    %1224 = vmatpush2.msra.mxu0 0.0
    %1225 = vmatprep.subr.mxu0 0.0
    %1226 = vmatpush2.msra.mxu0 0.0
    %1227 = vmatprep.subr.mxu0 0.0
    %1228 = vmatpush2.msra.mxu0 0.0
    %1229 = vmatprep.subr.mxu0 0.0
    %1230 = vmatpush2.msra.mxu0 0.0
    %1231 = vmatprep.subr.mxu0 0.0
    %1232 = vmatpush2.msra.mxu0 0.0
    %1233 = vmatprep.mubr.f32.mxu0 0.0
    %1234 = vmatmul.mubr.f32.gmra.mxu0 %v1166
    %v1235 = vpop.f32.mrf.mxu0
    %v1236 = vadd.f32 %v432, %v1235
    %v1237 = vpop.f32.mrf.mxu0
    %v1238 = vadd.f32 %v436, %v1237
    %1239 = vdwg.mxu0
    %1240 = vmatprep.subr.mxu0 0.0
    %1241 = vmatpush1.msra.mxu0 %v426
    %1242 = vmatprep.subr.mxu0 0.0
    %1243 = vmatpush1.msra.mxu0 %v423
    %1244 = vmatprep.subr.mxu0 0.0
    %1245 = vmatpush1.msra.mxu0 %v420
    %1246 = vmatprep.subr.mxu0 0.0
    %1247 = vmatpush1.msra.mxu0 %v417
    %1248 = vmatprep.subr.mxu0 0.0
    %1249 = vmatpush1.msra.mxu0 %v414
    %1250 = vmatprep.subr.mxu0 0.0
    %1251 = vmatpush1.msra.mxu0 %v411
    %1252 = vmatprep.subr.mxu0 0.0
    %1253 = vmatpush1.msra.mxu0 %v408
    %1254 = vmatprep.subr.mxu0 0.0
    %1255 = vmatpush1.msra.mxu0 %v405
    %1256 = vmatprep.subr.mxu0 0.0
    %1257 = vmatpush1.msra.mxu0 %v402
    %1258 = vmatprep.subr.mxu0 0.0
    %1259 = vmatpush1.msra.mxu0 %v399
    %1260 = vmatprep.subr.mxu0 0.0
    %1261 = vmatpush1.msra.mxu0 %v396
    %1262 = vmatprep.subr.mxu0 0.0
    %1263 = vmatpush1.msra.mxu0 %v393
    %1264 = vmatprep.subr.mxu0 0.0
    %1265 = vmatpush1.msra.mxu0 %v390
    %1266 = vmatprep.subr.mxu0 0.0
    %1267 = vmatpush1.msra.mxu0 %v387
    %1268 = vmatprep.subr.mxu0 0.0
    %1269 = vmatpush1.msra.mxu0 %v384
    %1270 = vmatprep.subr.mxu0 0.0
    %1271 = vmatpush1.msra.mxu0 %v381
    %1272 = vmatprep.subr.mxu0 0.0
    %1273 = vmatpush2.msra.mxu0 0.0
    %1274 = vmatprep.subr.mxu0 0.0
    %1275 = vmatpush2.msra.mxu0 0.0
    %1276 = vmatprep.subr.mxu0 0.0
    %1277 = vmatpush2.msra.mxu0 0.0
    %1278 = vmatprep.subr.mxu0 0.0
    %1279 = vmatpush2.msra.mxu0 0.0
    %1280 = vmatprep.subr.mxu0 0.0
    %1281 = vmatpush2.msra.mxu0 0.0
    %1282 = vmatprep.subr.mxu0 0.0
    %1283 = vmatpush2.msra.mxu0 0.0
    %1284 = vmatprep.subr.mxu0 0.0
    %1285 = vmatpush2.msra.mxu0 0.0
    %1286 = vmatprep.subr.mxu0 0.0
    %1287 = vmatpush2.msra.mxu0 0.0
    %1288 = vmatprep.subr.mxu0 0.0
    %1289 = vmatpush2.msra.mxu0 0.0
    %1290 = vmatprep.subr.mxu0 0.0
    %1291 = vmatpush2.msra.mxu0 0.0
    %1292 = vmatprep.subr.mxu0 0.0
    %1293 = vmatpush2.msra.mxu0 0.0
    %1294 = vmatprep.subr.mxu0 0.0
    %1295 = vmatpush2.msra.mxu0 0.0
    %1296 = vmatprep.subr.mxu0 0.0
    %1297 = vmatpush2.msra.mxu0 0.0
    %1298 = vmatprep.subr.mxu0 0.0
    %1299 = vmatpush2.msra.mxu0 0.0
    %1300 = vmatprep.subr.mxu0 0.0
    %1301 = vmatpush2.msra.mxu0 0.0
    %1302 = vmatprep.subr.mxu0 0.0
    %1303 = vmatpush2.msra.mxu0 0.0
    %1304 = vmatprep.mubr.f32.mxu0 0.0
    %1305 = vmatmul.mubr.f32.gmra.mxu0 %v1166
    %v1306 = vpop.f32.mrf.mxu0
    %v1307 = vadd.f32 %v440, %v1306
    %v1308 = vpop.f32.mrf.mxu0
    %1309 = vdwg.mxu0
    %v1310 = vadd.f32 %v252, %v1236
    %v1311 = vxor.u32 %v1310, 2147483648
    %v1312 = vmul.f32 %v1311, 1.442695
    %v1313 = vpow.pop %v1312
    %v1314 = vadd.f32 %v1313, 1.0
    %v1315 = vrcp.pop %v1314
    %v1316 = vmul.f32 1.0, %v1315
    %v1317 = vadd.f32 %v254, %v1238
    %v1318 = vxor.u32 %v1317, 2147483648
    %v1319 = vmul.f32 %v1318, 1.442695
    %v1320 = vpow.pop %v1319
    %v1321 = vadd.f32 %v1320, 1.0
    %v1322 = vrcp.pop %v1321
    %v1323 = vmul.f32 1.0, %v1322
    %v1324 = vmul.f32 %v1316, %v1307
    %v1325 = vadd.f32 %v361, %v1324
    %v1326 = vtanh.pop %v1325
    %v1327 = vsub.f32 1.0, %v1323
    %v1328 = vmul.f32 %v1327, %v1326
    %v1329 = vmul.f32 %v1323, %v1166
    %v1330 = vadd.f32 %v1328, %v1329
    %vm1331 = vcmp.gt.f32.partialorder %v444, 4.0
    %v1332 = vsel %vm1331, 1, 0
    %v1333 = vcvt.s32.f32 %v1332
    %1335 = vset.pattern.permute.xlu0 0
    %1336 = vperm.xlu0 %1335, %v1333
    %v1337 = vpop.permute.xlu0 %1336
    %v1339 = vmul.f32 %v1337, %v1330
    %v1340 = vsub.f32 1.0, %v1333
    %1342 = vset.pattern.permute.xlu0 0
    %1343 = vperm.xlu0 %1342, %v1340
    %v1344 = vpop.permute.xlu0 %1343
    %v1346 = vmul.f32 %v1344, %v1166
    %v1347 = vadd.f32 %v1339, %v1346
    %v1348 = vmul.f32 %v1337, %v1347
    %v1349 = vadd.f32 %v1168, %v1348
    %1350 = vmatprep.subr.mxu0 %v425
    %1351 = vmatpush1.msra.mxu0 %v424
    %1352 = vmatprep.subr.mxu0 %v422
    %1353 = vmatpush1.msra.mxu0 %v421
    %1354 = vmatprep.subr.mxu0 %v419
    %1355 = vmatpush1.msra.mxu0 %v418
    %1356 = vmatprep.subr.mxu0 %v416
    %1357 = vmatpush1.msra.mxu0 %v415
    %1358 = vmatprep.subr.mxu0 %v413
    %1359 = vmatpush1.msra.mxu0 %v412
    %1360 = vmatprep.subr.mxu0 %v410
    %1361 = vmatpush1.msra.mxu0 %v409
    %1362 = vmatprep.subr.mxu0 %v407
    %1363 = vmatpush1.msra.mxu0 %v406
    %1364 = vmatprep.subr.mxu0 %v404
    %1365 = vmatpush1.msra.mxu0 %v403
    %1366 = vmatprep.subr.mxu0 %v401
    %1367 = vmatpush1.msra.mxu0 %v400
    %1368 = vmatprep.subr.mxu0 %v398
    %1369 = vmatpush1.msra.mxu0 %v397
    %1370 = vmatprep.subr.mxu0 %v395
    %1371 = vmatpush1.msra.mxu0 %v394
    %1372 = vmatprep.subr.mxu0 %v392
    %1373 = vmatpush1.msra.mxu0 %v391
    %1374 = vmatprep.subr.mxu0 %v389
    %1375 = vmatpush1.msra.mxu0 %v388
    %1376 = vmatprep.subr.mxu0 %v386
    %1377 = vmatpush1.msra.mxu0 %v385
    %1378 = vmatprep.subr.mxu0 %v383
    %1379 = vmatpush1.msra.mxu0 %v382
    %1380 = vmatprep.subr.mxu0 %v380
    %1381 = vmatpush1.msra.mxu0 %v379
    %1382 = vmatprep.subr.mxu0 0.0
    %1383 = vmatpush2.msra.mxu0 0.0
    %1384 = vmatprep.subr.mxu0 0.0
    %1385 = vmatpush2.msra.mxu0 0.0
    %1386 = vmatprep.subr.mxu0 0.0
    %1387 = vmatpush2.msra.mxu0 0.0
    %1388 = vmatprep.subr.mxu0 0.0
    %1389 = vmatpush2.msra.mxu0 0.0
    %1390 = vmatprep.subr.mxu0 0.0
    %1391 = vmatpush2.msra.mxu0 0.0
    %1392 = vmatprep.subr.mxu0 0.0
    %1393 = vmatpush2.msra.mxu0 0.0
    %1394 = vmatprep.subr.mxu0 0.0
    %1395 = vmatpush2.msra.mxu0 0.0
    %1396 = vmatprep.subr.mxu0 0.0
    %1397 = vmatpush2.msra.mxu0 0.0
    %1398 = vmatprep.subr.mxu0 0.0
    %1399 = vmatpush2.msra.mxu0 0.0
    %1400 = vmatprep.subr.mxu0 0.0
    %1401 = vmatpush2.msra.mxu0 0.0
    %1402 = vmatprep.subr.mxu0 0.0
    %1403 = vmatpush2.msra.mxu0 0.0
    %1404 = vmatprep.subr.mxu0 0.0
    %1405 = vmatpush2.msra.mxu0 0.0
    %1406 = vmatprep.subr.mxu0 0.0
    %1407 = vmatpush2.msra.mxu0 0.0
    %1408 = vmatprep.subr.mxu0 0.0
    %1409 = vmatpush2.msra.mxu0 0.0
    %1410 = vmatprep.subr.mxu0 0.0
    %1411 = vmatpush2.msra.mxu0 0.0
    %1412 = vmatprep.subr.mxu0 0.0
    %1413 = vmatpush2.msra.mxu0 0.0
    %1414 = vmatprep.mubr.f32.mxu0 0.0
    %1415 = vmatmul.mubr.f32.gmra.mxu0 %v1347
    %v1416 = vpop.f32.mrf.mxu0
    %v1417 = vadd.f32 %v432, %v1416
    %v1418 = vpop.f32.mrf.mxu0
    %v1419 = vadd.f32 %v436, %v1418
    %1420 = vdwg.mxu0
    %1421 = vmatprep.subr.mxu0 0.0
    %1422 = vmatpush1.msra.mxu0 %v426
    %1423 = vmatprep.subr.mxu0 0.0
    %1424 = vmatpush1.msra.mxu0 %v423
    %1425 = vmatprep.subr.mxu0 0.0
    %1426 = vmatpush1.msra.mxu0 %v420
    %1427 = vmatprep.subr.mxu0 0.0
    %1428 = vmatpush1.msra.mxu0 %v417
    %1429 = vmatprep.subr.mxu0 0.0
    %1430 = vmatpush1.msra.mxu0 %v414
    %1431 = vmatprep.subr.mxu0 0.0
    %1432 = vmatpush1.msra.mxu0 %v411
    %1433 = vmatprep.subr.mxu0 0.0
    %1434 = vmatpush1.msra.mxu0 %v408
    %1435 = vmatprep.subr.mxu0 0.0
    %1436 = vmatpush1.msra.mxu0 %v405
    %1437 = vmatprep.subr.mxu0 0.0
    %1438 = vmatpush1.msra.mxu0 %v402
    %1439 = vmatprep.subr.mxu0 0.0
    %1440 = vmatpush1.msra.mxu0 %v399
    %1441 = vmatprep.subr.mxu0 0.0
    %1442 = vmatpush1.msra.mxu0 %v396
    %1443 = vmatprep.subr.mxu0 0.0
    %1444 = vmatpush1.msra.mxu0 %v393
    %1445 = vmatprep.subr.mxu0 0.0
    %1446 = vmatpush1.msra.mxu0 %v390
    %1447 = vmatprep.subr.mxu0 0.0
    %1448 = vmatpush1.msra.mxu0 %v387
    %1449 = vmatprep.subr.mxu0 0.0
    %1450 = vmatpush1.msra.mxu0 %v384
    %1451 = vmatprep.subr.mxu0 0.0
    %1452 = vmatpush1.msra.mxu0 %v381
    %1453 = vmatprep.subr.mxu0 0.0
    %1454 = vmatpush2.msra.mxu0 0.0
    %1455 = vmatprep.subr.mxu0 0.0
    %1456 = vmatpush2.msra.mxu0 0.0
    %1457 = vmatprep.subr.mxu0 0.0
    %1458 = vmatpush2.msra.mxu0 0.0
    %1459 = vmatprep.subr.mxu0 0.0
    %1460 = vmatpush2.msra.mxu0 0.0
    %1461 = vmatprep.subr.mxu0 0.0
    %1462 = vmatpush2.msra.mxu0 0.0
    %1463 = vmatprep.subr.mxu0 0.0
    %1464 = vmatpush2.msra.mxu0 0.0
    %1465 = vmatprep.subr.mxu0 0.0
    %1466 = vmatpush2.msra.mxu0 0.0
    %1467 = vmatprep.subr.mxu0 0.0
    %1468 = vmatpush2.msra.mxu0 0.0
    %1469 = vmatprep.subr.mxu0 0.0
    %1470 = vmatpush2.msra.mxu0 0.0
    %1471 = vmatprep.subr.mxu0 0.0
    %1472 = vmatpush2.msra.mxu0 0.0
    %1473 = vmatprep.subr.mxu0 0.0
    %1474 = vmatpush2.msra.mxu0 0.0
    %1475 = vmatprep.subr.mxu0 0.0
    %1476 = vmatpush2.msra.mxu0 0.0
    %1477 = vmatprep.subr.mxu0 0.0
    %1478 = vmatpush2.msra.mxu0 0.0
    %1479 = vmatprep.subr.mxu0 0.0
    %1480 = vmatpush2.msra.mxu0 0.0
    %1481 = vmatprep.subr.mxu0 0.0
    %1482 = vmatpush2.msra.mxu0 0.0
    %1483 = vmatprep.subr.mxu0 0.0
    %1484 = vmatpush2.msra.mxu0 0.0
    %1485 = vmatprep.mubr.f32.mxu0 0.0
    %1486 = vmatmul.mubr.f32.gmra.mxu0 %v1347
    %v1487 = vpop.f32.mrf.mxu0
    %v1488 = vadd.f32 %v440, %v1487
    %v1489 = vpop.f32.mrf.mxu0
    %1490 = vdwg.mxu0
    %v1491 = vadd.f32 %v258, %v1417
    %v1492 = vxor.u32 %v1491, 2147483648
    %v1493 = vmul.f32 %v1492, 1.442695
    %v1494 = vpow.pop %v1493
    %v1495 = vadd.f32 %v1494, 1.0
    %v1496 = vrcp.pop %v1495
    %v1497 = vmul.f32 1.0, %v1496
    %v1498 = vadd.f32 %v260, %v1419
    %v1499 = vxor.u32 %v1498, 2147483648
    %v1500 = vmul.f32 %v1499, 1.442695
    %v1501 = vpow.pop %v1500
    %v1502 = vadd.f32 %v1501, 1.0
    %v1503 = vrcp.pop %v1502
    %v1504 = vmul.f32 1.0, %v1503
    %v1505 = vmul.f32 %v1497, %v1488
    %v1506 = vadd.f32 %v366, %v1505
    %v1507 = vtanh.pop %v1506
    %v1508 = vsub.f32 1.0, %v1504
    %v1509 = vmul.f32 %v1508, %v1507
    %v1510 = vmul.f32 %v1504, %v1347
    %v1511 = vadd.f32 %v1509, %v1510
    %vm1512 = vcmp.gt.f32.partialorder %v444, 5.0
    %v1513 = vsel %vm1512, 1, 0
    %v1514 = vcvt.s32.f32 %v1513
    %1516 = vset.pattern.permute.xlu0 0
    %1517 = vperm.xlu0 %1516, %v1514
    %v1518 = vpop.permute.xlu0 %1517
    %v1520 = vmul.f32 %v1518, %v1511
    %v1521 = vsub.f32 1.0, %v1514
    %1523 = vset.pattern.permute.xlu0 0
    %1524 = vperm.xlu0 %1523, %v1521
    %v1525 = vpop.permute.xlu0 %1524
    %v1527 = vmul.f32 %v1525, %v1347
    %v1528 = vadd.f32 %v1520, %v1527
    %v1529 = vmul.f32 %v1518, %v1528
    %v1530 = vadd.f32 %v1349, %v1529
    %1531 = vmatprep.subr.mxu0 %v425
    %1532 = vmatpush1.msra.mxu0 %v424
    %1533 = vmatprep.subr.mxu0 %v422
    %1534 = vmatpush1.msra.mxu0 %v421
    %1535 = vmatprep.subr.mxu0 %v419
    %1536 = vmatpush1.msra.mxu0 %v418
    %1537 = vmatprep.subr.mxu0 %v416
    %1538 = vmatpush1.msra.mxu0 %v415
    %1539 = vmatprep.subr.mxu0 %v413
    %1540 = vmatpush1.msra.mxu0 %v412
    %1541 = vmatprep.subr.mxu0 %v410
    %1542 = vmatpush1.msra.mxu0 %v409
    %1543 = vmatprep.subr.mxu0 %v407
    %1544 = vmatpush1.msra.mxu0 %v406
    %1545 = vmatprep.subr.mxu0 %v404
    %1546 = vmatpush1.msra.mxu0 %v403
    %1547 = vmatprep.subr.mxu0 %v401
    %1548 = vmatpush1.msra.mxu0 %v400
    %1549 = vmatprep.subr.mxu0 %v398
    %1550 = vmatpush1.msra.mxu0 %v397
    %1551 = vmatprep.subr.mxu0 %v395
    %1552 = vmatpush1.msra.mxu0 %v394
    %1553 = vmatprep.subr.mxu0 %v392
    %1554 = vmatpush1.msra.mxu0 %v391
    %1555 = vmatprep.subr.mxu0 %v389
    %1556 = vmatpush1.msra.mxu0 %v388
    %1557 = vmatprep.subr.mxu0 %v386
    %1558 = vmatpush1.msra.mxu0 %v385
    %1559 = vmatprep.subr.mxu0 %v383
    %1560 = vmatpush1.msra.mxu0 %v382
    %1561 = vmatprep.subr.mxu0 %v380
    %1562 = vmatpush1.msra.mxu0 %v379
    %1563 = vmatprep.subr.mxu0 0.0
    %1564 = vmatpush2.msra.mxu0 0.0
    %1565 = vmatprep.subr.mxu0 0.0
    %1566 = vmatpush2.msra.mxu0 0.0
    %1567 = vmatprep.subr.mxu0 0.0
    %1568 = vmatpush2.msra.mxu0 0.0
    %1569 = vmatprep.subr.mxu0 0.0
    %1570 = vmatpush2.msra.mxu0 0.0
    %1571 = vmatprep.subr.mxu0 0.0
    %1572 = vmatpush2.msra.mxu0 0.0
    %1573 = vmatprep.subr.mxu0 0.0
    %1574 = vmatpush2.msra.mxu0 0.0
    %1575 = vmatprep.subr.mxu0 0.0
    %1576 = vmatpush2.msra.mxu0 0.0
    %1577 = vmatprep.subr.mxu0 0.0
    %1578 = vmatpush2.msra.mxu0 0.0
    %1579 = vmatprep.subr.mxu0 0.0
    %1580 = vmatpush2.msra.mxu0 0.0
    %1581 = vmatprep.subr.mxu0 0.0
    %1582 = vmatpush2.msra.mxu0 0.0
    %1583 = vmatprep.subr.mxu0 0.0
    %1584 = vmatpush2.msra.mxu0 0.0
    %1585 = vmatprep.subr.mxu0 0.0
    %1586 = vmatpush2.msra.mxu0 0.0
    %1587 = vmatprep.subr.mxu0 0.0
    %1588 = vmatpush2.msra.mxu0 0.0
    %1589 = vmatprep.subr.mxu0 0.0
    %1590 = vmatpush2.msra.mxu0 0.0
    %1591 = vmatprep.subr.mxu0 0.0
    %1592 = vmatpush2.msra.mxu0 0.0
    %1593 = vmatprep.subr.mxu0 0.0
    %1594 = vmatpush2.msra.mxu0 0.0
    %1595 = vmatprep.mubr.f32.mxu0 0.0
    %1596 = vmatmul.mubr.f32.gmra.mxu0 %v1528
    %v1597 = vpop.f32.mrf.mxu0
    %v1598 = vadd.f32 %v432, %v1597
    %v1599 = vpop.f32.mrf.mxu0
    %v1600 = vadd.f32 %v436, %v1599
    %1601 = vdwg.mxu0
    %1602 = vmatprep.subr.mxu0 0.0
    %1603 = vmatpush1.msra.mxu0 %v426
    %1604 = vmatprep.subr.mxu0 0.0
    %1605 = vmatpush1.msra.mxu0 %v423
    %1606 = vmatprep.subr.mxu0 0.0
    %1607 = vmatpush1.msra.mxu0 %v420
    %1608 = vmatprep.subr.mxu0 0.0
    %1609 = vmatpush1.msra.mxu0 %v417
    %1610 = vmatprep.subr.mxu0 0.0
    %1611 = vmatpush1.msra.mxu0 %v414
    %1612 = vmatprep.subr.mxu0 0.0
    %1613 = vmatpush1.msra.mxu0 %v411
    %1614 = vmatprep.subr.mxu0 0.0
    %1615 = vmatpush1.msra.mxu0 %v408
    %1616 = vmatprep.subr.mxu0 0.0
    %1617 = vmatpush1.msra.mxu0 %v405
    %1618 = vmatprep.subr.mxu0 0.0
    %1619 = vmatpush1.msra.mxu0 %v402
    %1620 = vmatprep.subr.mxu0 0.0
    %1621 = vmatpush1.msra.mxu0 %v399
    %1622 = vmatprep.subr.mxu0 0.0
    %1623 = vmatpush1.msra.mxu0 %v396
    %1624 = vmatprep.subr.mxu0 0.0
    %1625 = vmatpush1.msra.mxu0 %v393
    %1626 = vmatprep.subr.mxu0 0.0
    %1627 = vmatpush1.msra.mxu0 %v390
    %1628 = vmatprep.subr.mxu0 0.0
    %1629 = vmatpush1.msra.mxu0 %v387
    %1630 = vmatprep.subr.mxu0 0.0
    %1631 = vmatpush1.msra.mxu0 %v384
    %1632 = vmatprep.subr.mxu0 0.0
    %1633 = vmatpush1.msra.mxu0 %v381
    %1634 = vmatprep.subr.mxu0 0.0
    %1635 = vmatpush2.msra.mxu0 0.0
    %1636 = vmatprep.subr.mxu0 0.0
    %1637 = vmatpush2.msra.mxu0 0.0
    %1638 = vmatprep.subr.mxu0 0.0
    %1639 = vmatpush2.msra.mxu0 0.0
    %1640 = vmatprep.subr.mxu0 0.0
    %1641 = vmatpush2.msra.mxu0 0.0
    %1642 = vmatprep.subr.mxu0 0.0
    %1643 = vmatpush2.msra.mxu0 0.0
    %1644 = vmatprep.subr.mxu0 0.0
    %1645 = vmatpush2.msra.mxu0 0.0
    %1646 = vmatprep.subr.mxu0 0.0
    %1647 = vmatpush2.msra.mxu0 0.0
    %1648 = vmatprep.subr.mxu0 0.0
    %1649 = vmatpush2.msra.mxu0 0.0
    %1650 = vmatprep.subr.mxu0 0.0
    %1651 = vmatpush2.msra.mxu0 0.0
    %1652 = vmatprep.subr.mxu0 0.0
    %1653 = vmatpush2.msra.mxu0 0.0
    %1654 = vmatprep.subr.mxu0 0.0
    %1655 = vmatpush2.msra.mxu0 0.0
    %1656 = vmatprep.subr.mxu0 0.0
    %1657 = vmatpush2.msra.mxu0 0.0
    %1658 = vmatprep.subr.mxu0 0.0
    %1659 = vmatpush2.msra.mxu0 0.0
    %1660 = vmatprep.subr.mxu0 0.0
    %1661 = vmatpush2.msra.mxu0 0.0
    %1662 = vmatprep.subr.mxu0 0.0
    %1663 = vmatpush2.msra.mxu0 0.0
    %1664 = vmatprep.subr.mxu0 0.0
    %1665 = vmatpush2.msra.mxu0 0.0
    %1666 = vmatprep.mubr.f32.mxu0 0.0
    %1667 = vmatmul.mubr.f32.gmra.mxu0 %v1528
    %v1668 = vpop.f32.mrf.mxu0
    %v1669 = vadd.f32 %v440, %v1668
    %v1670 = vpop.f32.mrf.mxu0
    %1671 = vdwg.mxu0
    %v1672 = vadd.f32 %v264, %v1598
    %v1673 = vxor.u32 %v1672, 2147483648
    %v1674 = vmul.f32 %v1673, 1.442695
    %v1675 = vpow.pop %v1674
    %v1676 = vadd.f32 %v1675, 1.0
    %v1677 = vrcp.pop %v1676
    %v1678 = vmul.f32 1.0, %v1677
    %v1679 = vadd.f32 %v266, %v1600
    %v1680 = vxor.u32 %v1679, 2147483648
    %v1681 = vmul.f32 %v1680, 1.442695
    %v1682 = vpow.pop %v1681
    %v1683 = vadd.f32 %v1682, 1.0
    %v1684 = vrcp.pop %v1683
    %v1685 = vmul.f32 1.0, %v1684
    %v1686 = vmul.f32 %v1678, %v1669
    %v1687 = vadd.f32 %v371, %v1686
    %v1688 = vtanh.pop %v1687
    %v1689 = vsub.f32 1.0, %v1685
    %v1690 = vmul.f32 %v1689, %v1688
    %v1691 = vmul.f32 %v1685, %v1528
    %v1692 = vadd.f32 %v1690, %v1691
    %vm1693 = vcmp.gt.f32.partialorder %v444, 6.0
    %v1694 = vsel %vm1693, 1, 0
    %v1695 = vcvt.s32.f32 %v1694
    %1697 = vset.pattern.permute.xlu0 0
    %1698 = vperm.xlu0 %1697, %v1695
    %v1699 = vpop.permute.xlu0 %1698
    %v1701 = vmul.f32 %v1699, %v1692
    %v1702 = vsub.f32 1.0, %v1695
    %1704 = vset.pattern.permute.xlu0 0
    %1705 = vperm.xlu0 %1704, %v1702
    %v1706 = vpop.permute.xlu0 %1705
    %v1708 = vmul.f32 %v1706, %v1528
    %v1709 = vadd.f32 %v1701, %v1708
    %v1710 = vmul.f32 %v1699, %v1709
    %v1711 = vadd.f32 %v1530, %v1710
    %1712 = vmatprep.subr.mxu0 %v425
    %1713 = vmatpush1.msra.mxu0 %v424
    %1714 = vmatprep.subr.mxu0 %v422
    %1715 = vmatpush1.msra.mxu0 %v421
    %1716 = vmatprep.subr.mxu0 %v419
    %1717 = vmatpush1.msra.mxu0 %v418
    %1718 = vmatprep.subr.mxu0 %v416
    %1719 = vmatpush1.msra.mxu0 %v415
    %1720 = vmatprep.subr.mxu0 %v413
    %1721 = vmatpush1.msra.mxu0 %v412
    %1722 = vmatprep.subr.mxu0 %v410
    %1723 = vmatpush1.msra.mxu0 %v409
    %1724 = vmatprep.subr.mxu0 %v407
    %1725 = vmatpush1.msra.mxu0 %v406
    %1726 = vmatprep.subr.mxu0 %v404
    %1727 = vmatpush1.msra.mxu0 %v403
    %1728 = vmatprep.subr.mxu0 %v401
    %1729 = vmatpush1.msra.mxu0 %v400
    %1730 = vmatprep.subr.mxu0 %v398
    %1731 = vmatpush1.msra.mxu0 %v397
    %1732 = vmatprep.subr.mxu0 %v395
    %1733 = vmatpush1.msra.mxu0 %v394
    %1734 = vmatprep.subr.mxu0 %v392
    %1735 = vmatpush1.msra.mxu0 %v391
    %1736 = vmatprep.subr.mxu0 %v389
    %1737 = vmatpush1.msra.mxu0 %v388
    %1738 = vmatprep.subr.mxu0 %v386
    %1739 = vmatpush1.msra.mxu0 %v385
    %1740 = vmatprep.subr.mxu0 %v383
    %1741 = vmatpush1.msra.mxu0 %v382
    %1742 = vmatprep.subr.mxu0 %v380
    %1743 = vmatpush1.msra.mxu0 %v379
    %1744 = vmatprep.subr.mxu0 0.0
    %1745 = vmatpush2.msra.mxu0 0.0
    %1746 = vmatprep.subr.mxu0 0.0
    %1747 = vmatpush2.msra.mxu0 0.0
    %1748 = vmatprep.subr.mxu0 0.0
    %1749 = vmatpush2.msra.mxu0 0.0
    %1750 = vmatprep.subr.mxu0 0.0
    %1751 = vmatpush2.msra.mxu0 0.0
    %1752 = vmatprep.subr.mxu0 0.0
    %1753 = vmatpush2.msra.mxu0 0.0
    %1754 = vmatprep.subr.mxu0 0.0
    %1755 = vmatpush2.msra.mxu0 0.0
    %1756 = vmatprep.subr.mxu0 0.0
    %1757 = vmatpush2.msra.mxu0 0.0
    %1758 = vmatprep.subr.mxu0 0.0
    %1759 = vmatpush2.msra.mxu0 0.0
    %1760 = vmatprep.subr.mxu0 0.0
    %1761 = vmatpush2.msra.mxu0 0.0
    %1762 = vmatprep.subr.mxu0 0.0
    %1763 = vmatpush2.msra.mxu0 0.0
    %1764 = vmatprep.subr.mxu0 0.0
    %1765 = vmatpush2.msra.mxu0 0.0
    %1766 = vmatprep.subr.mxu0 0.0
    %1767 = vmatpush2.msra.mxu0 0.0
    %1768 = vmatprep.subr.mxu0 0.0
    %1769 = vmatpush2.msra.mxu0 0.0
    %1770 = vmatprep.subr.mxu0 0.0
    %1771 = vmatpush2.msra.mxu0 0.0
    %1772 = vmatprep.subr.mxu0 0.0
    %1773 = vmatpush2.msra.mxu0 0.0
    %1774 = vmatprep.subr.mxu0 0.0
    %1775 = vmatpush2.msra.mxu0 0.0
    %1776 = vmatprep.mubr.f32.mxu0 0.0
    %1777 = vmatmul.mubr.f32.gmra.mxu0 %v1709
    %v1778 = vpop.f32.mrf.mxu0
    %v1779 = vadd.f32 %v432, %v1778
    %v1780 = vpop.f32.mrf.mxu0
    %v1781 = vadd.f32 %v436, %v1780
    %1782 = vdwg.mxu0
    %1783 = vmatprep.subr.mxu0 0.0
    %1784 = vmatpush1.msra.mxu0 %v426
    %1785 = vmatprep.subr.mxu0 0.0
    %1786 = vmatpush1.msra.mxu0 %v423
    %1787 = vmatprep.subr.mxu0 0.0
    %1788 = vmatpush1.msra.mxu0 %v420
    %1789 = vmatprep.subr.mxu0 0.0
    %1790 = vmatpush1.msra.mxu0 %v417
    %1791 = vmatprep.subr.mxu0 0.0
    %1792 = vmatpush1.msra.mxu0 %v414
    %1793 = vmatprep.subr.mxu0 0.0
    %1794 = vmatpush1.msra.mxu0 %v411
    %1795 = vmatprep.subr.mxu0 0.0
    %1796 = vmatpush1.msra.mxu0 %v408
    %1797 = vmatprep.subr.mxu0 0.0
    %1798 = vmatpush1.msra.mxu0 %v405
    %1799 = vmatprep.subr.mxu0 0.0
    %1800 = vmatpush1.msra.mxu0 %v402
    %1801 = vmatprep.subr.mxu0 0.0
    %1802 = vmatpush1.msra.mxu0 %v399
    %1803 = vmatprep.subr.mxu0 0.0
    %1804 = vmatpush1.msra.mxu0 %v396
    %1805 = vmatprep.subr.mxu0 0.0
    %1806 = vmatpush1.msra.mxu0 %v393
    %1807 = vmatprep.subr.mxu0 0.0
    %1808 = vmatpush1.msra.mxu0 %v390
    %1809 = vmatprep.subr.mxu0 0.0
    %1810 = vmatpush1.msra.mxu0 %v387
    %1811 = vmatprep.subr.mxu0 0.0
    %1812 = vmatpush1.msra.mxu0 %v384
    %1813 = vmatprep.subr.mxu0 0.0
    %1814 = vmatpush1.msra.mxu0 %v381
    %1815 = vmatprep.subr.mxu0 0.0
    %1816 = vmatpush2.msra.mxu0 0.0
    %1817 = vmatprep.subr.mxu0 0.0
    %1818 = vmatpush2.msra.mxu0 0.0
    %1819 = vmatprep.subr.mxu0 0.0
    %1820 = vmatpush2.msra.mxu0 0.0
    %1821 = vmatprep.subr.mxu0 0.0
    %1822 = vmatpush2.msra.mxu0 0.0
    %1823 = vmatprep.subr.mxu0 0.0
    %1824 = vmatpush2.msra.mxu0 0.0
    %1825 = vmatprep.subr.mxu0 0.0
    %1826 = vmatpush2.msra.mxu0 0.0
    %1827 = vmatprep.subr.mxu0 0.0
    %1828 = vmatpush2.msra.mxu0 0.0
    %1829 = vmatprep.subr.mxu0 0.0
    %1830 = vmatpush2.msra.mxu0 0.0
    %1831 = vmatprep.subr.mxu0 0.0
    %1832 = vmatpush2.msra.mxu0 0.0
    %1833 = vmatprep.subr.mxu0 0.0
    %1834 = vmatpush2.msra.mxu0 0.0
    %1835 = vmatprep.subr.mxu0 0.0
    %1836 = vmatpush2.msra.mxu0 0.0
    %1837 = vmatprep.subr.mxu0 0.0
    %1838 = vmatpush2.msra.mxu0 0.0
    %1839 = vmatprep.subr.mxu0 0.0
    %1840 = vmatpush2.msra.mxu0 0.0
    %1841 = vmatprep.subr.mxu0 0.0
    %1842 = vmatpush2.msra.mxu0 0.0
    %1843 = vmatprep.subr.mxu0 0.0
    %1844 = vmatpush2.msra.mxu0 0.0
    %1845 = vmatprep.subr.mxu0 0.0
    %1846 = vmatpush2.msra.mxu0 0.0
    %1847 = vmatprep.mubr.f32.mxu0 0.0
    %1848 = vmatmul.mubr.f32.gmra.mxu0 %v1709
    %v1849 = vpop.f32.mrf.mxu0
    %v1850 = vadd.f32 %v440, %v1849
    %v1851 = vpop.f32.mrf.mxu0
    %1852 = vdwg.mxu0
    %v1853 = vadd.f32 %v270, %v1779
    %v1854 = vxor.u32 %v1853, 2147483648
    %v1855 = vmul.f32 %v1854, 1.442695
    %v1856 = vpow.pop %v1855
    %v1857 = vadd.f32 %v1856, 1.0
    %v1858 = vrcp.pop %v1857
    %v1859 = vmul.f32 1.0, %v1858
    %v1860 = vadd.f32 %v272, %v1781
    %v1861 = vxor.u32 %v1860, 2147483648
    %v1862 = vmul.f32 %v1861, 1.442695
    %v1863 = vpow.pop %v1862
    %v1864 = vadd.f32 %v1863, 1.0
    %v1865 = vrcp.pop %v1864
    %v1866 = vmul.f32 1.0, %v1865
    %v1867 = vmul.f32 %v1859, %v1850
    %v1868 = vadd.f32 %v376, %v1867
    %v1869 = vtanh.pop %v1868
    %v1870 = vsub.f32 1.0, %v1866
    %v1871 = vmul.f32 %v1870, %v1869
    %v1872 = vmul.f32 %v1866, %v1709
    %v1873 = vadd.f32 %v1871, %v1872
    %vm1874 = vcmp.gt.f32.partialorder %v444, 7.0
    %v1875 = vsel %vm1874, 1, 0
    %v1876 = vcvt.s32.f32 %v1875
    %1878 = vset.pattern.permute.xlu0 0
    %1879 = vperm.xlu0 %1878, %v1876
    %v1880 = vpop.permute.xlu0 %1879
    %v1882 = vmul.f32 %v1880, %v1873
    %v1883 = vsub.f32 1.0, %v1876
    %1885 = vset.pattern.permute.xlu0 0
    %1886 = vperm.xlu0 %1885, %v1883
    %v1887 = vpop.permute.xlu0 %1886
    %v1889 = vmul.f32 %v1887, %v1709
    %v1890 = vadd.f32 %v1882, %v1889
    %v1891 = vmul.f32 %v1880, %v1890
    %v1892 = vadd.f32 %v1711, %v1891
    %v1893 = vld [vmem:[#allocation8] sm:$0xff]
    %v1894 = vld [vmem:[#allocation8 + $0x8] sm:$0xff]
    %v1895 = vld [vmem:[#allocation8 + $0x10] sm:$0xff]
    %v1896 = vld [vmem:[#allocation8 + $0x18] sm:$0xff]
    %v1897 = vld [vmem:[#allocation8 + $0x20] sm:$0xff]
    %v1898 = vld [vmem:[#allocation8 + $0x28] sm:$0xff]
    %v1899 = vld [vmem:[#allocation8 + $0x30] sm:$0xff]
    %v1900 = vld [vmem:[#allocation8 + $0x38] sm:$0xff]
    %v1901 = vld [vmem:[#allocation8 + $0x40] sm:$0xff]
    %v1902 = vld [vmem:[#allocation8 + $0x48] sm:$0xff]
    %v1903 = vld [vmem:[#allocation8 + $0x50] sm:$0xff]
    %v1904 = vld [vmem:[#allocation8 + $0x58] sm:$0xff]
    %v1905 = vld [vmem:[#allocation8 + $0x60] sm:$0xff]
    %v1906 = vld [vmem:[#allocation8 + $0x68] sm:$0xff]
    %v1907 = vld [vmem:[#allocation8 + $0x70] sm:$0xff]
    %v1908 = vld [vmem:[#allocation8 + $0x78] sm:$0xff]
    %v1909 = vld [vmem:[#allocation8 + $0x80] sm:$0xff]
    %v1910 = vld [vmem:[#allocation8 + $0x88] sm:$0xff]
    %v1911 = vld [vmem:[#allocation8 + $0x90] sm:$0xff]
    %v1912 = vld [vmem:[#allocation8 + $0x98] sm:$0xff]
    %v1913 = vld [vmem:[#allocation8 + $0xa0] sm:$0xff]
    %v1914 = vld [vmem:[#allocation8 + $0xa8] sm:$0xff]
    %v1915 = vld [vmem:[#allocation8 + $0xb0] sm:$0xff]
    %v1916 = vld [vmem:[#allocation8 + $0xb8] sm:$0xff]
    %v1917 = vld [vmem:[#allocation8 + $0xc0] sm:$0xff]
    %v1918 = vld [vmem:[#allocation8 + $0xc8] sm:$0xff]
    %v1919 = vld [vmem:[#allocation8 + $0xd0] sm:$0xff]
    %v1920 = vld [vmem:[#allocation8 + $0xd8] sm:$0xff]
    %v1921 = vld [vmem:[#allocation8 + $0xe0] sm:$0xff]
    %v1922 = vld [vmem:[#allocation8 + $0xe8] sm:$0xff]
    %v1923 = vld [vmem:[#allocation8 + $0xf0] sm:$0xff]
    %v1924 = vld [vmem:[#allocation8 + $0xf8] sm:$0xff]
    %v1925 = vld [vmem:[%s7] sm:$0x3]
    %v1927 = vlaneseq
    %v1928 = vshrl.u32 %v1927, 7
    %v1929 = vsub.s32 0, %v1928
    %v1930 = vrot.slane %v1925, %v1929
    %v1931 = vlaneseq
    %v1932 = vshrl.u32 %v1931, 7
    %v1933 = vsub.s32 1, %v1932
    %v1934 = vrot.slane %v1925, %v1933
    %1937 = vmatprep.subr.mxu0 %v1924
    %1938 = vmatpush1.msra.mxu0 %v1923
    %1939 = vmatprep.subr.mxu0 %v1922
    %1940 = vmatpush1.msra.mxu0 %v1921
    %1941 = vmatprep.subr.mxu0 %v1920
    %1942 = vmatpush1.msra.mxu0 %v1919
    %1943 = vmatprep.subr.mxu0 %v1918
    %1944 = vmatpush1.msra.mxu0 %v1917
    %1945 = vmatprep.subr.mxu0 %v1916
    %1946 = vmatpush1.msra.mxu0 %v1915
    %1947 = vmatprep.subr.mxu0 %v1914
    %1948 = vmatpush1.msra.mxu0 %v1913
    %1949 = vmatprep.subr.mxu0 %v1912
    %1950 = vmatpush1.msra.mxu0 %v1911
    %1951 = vmatprep.subr.mxu0 %v1910
    %1952 = vmatpush1.msra.mxu0 %v1909
    %1953 = vmatprep.subr.mxu0 %v1908
    %1954 = vmatpush1.msra.mxu0 %v1907
    %1955 = vmatprep.subr.mxu0 %v1906
    %1956 = vmatpush1.msra.mxu0 %v1905
    %1957 = vmatprep.subr.mxu0 %v1904
    %1958 = vmatpush1.msra.mxu0 %v1903
    %1959 = vmatprep.subr.mxu0 %v1902
    %1960 = vmatpush1.msra.mxu0 %v1901
    %1961 = vmatprep.subr.mxu0 %v1900
    %1962 = vmatpush1.msra.mxu0 %v1899
    %1963 = vmatprep.subr.mxu0 %v1898
    %1964 = vmatpush1.msra.mxu0 %v1897
    %1965 = vmatprep.subr.mxu0 %v1896
    %1966 = vmatpush1.msra.mxu0 %v1895
    %1967 = vmatprep.subr.mxu0 %v1894
    %1968 = vmatpush1.msra.mxu0 %v1893
    %1969 = vmatprep.subr.mxu0 0.0
    %1970 = vmatpush2.msra.mxu0 0.0
    %1971 = vmatprep.subr.mxu0 0.0
    %1972 = vmatpush2.msra.mxu0 0.0
    %1973 = vmatprep.subr.mxu0 0.0
    %1974 = vmatpush2.msra.mxu0 0.0
    %1975 = vmatprep.subr.mxu0 0.0
    %1976 = vmatpush2.msra.mxu0 0.0
    %1977 = vmatprep.subr.mxu0 0.0
    %1978 = vmatpush2.msra.mxu0 0.0
    %1979 = vmatprep.subr.mxu0 0.0
    %1980 = vmatpush2.msra.mxu0 0.0
    %1981 = vmatprep.subr.mxu0 0.0
    %1982 = vmatpush2.msra.mxu0 0.0
    %1983 = vmatprep.subr.mxu0 0.0
    %1984 = vmatpush2.msra.mxu0 0.0
    %1985 = vmatprep.subr.mxu0 0.0
    %1986 = vmatpush2.msra.mxu0 0.0
    %1987 = vmatprep.subr.mxu0 0.0
    %1988 = vmatpush2.msra.mxu0 0.0
    %1989 = vmatprep.subr.mxu0 0.0
    %1990 = vmatpush2.msra.mxu0 0.0
    %1991 = vmatprep.subr.mxu0 0.0
    %1992 = vmatpush2.msra.mxu0 0.0
    %1993 = vmatprep.subr.mxu0 0.0
    %1994 = vmatpush2.msra.mxu0 0.0
    %1995 = vmatprep.subr.mxu0 0.0
    %1996 = vmatpush2.msra.mxu0 0.0
    %1997 = vmatprep.subr.mxu0 0.0
    %1998 = vmatpush2.msra.mxu0 0.0
    %1999 = vmatprep.subr.mxu0 0.0
    %2000 = vmatpush2.msra.mxu0 0.0
    %2001 = vmatprep.mubr.f32.mxu0 0.0
    %2002 = vmatmul.mubr.f32.gmra.mxu0 %v1892
    %v2003 = vpop.f32.mrf.mxu0
    %v2004 = vadd.f32 %v1930, %v2003
    %v2005 = vpop.f32.mrf.mxu0
    %v2006 = vadd.f32 %v1934, %v2005
    %2007 = vdwg.mxu0
    %v2008 = vmul.f32 %v2006, 0.5
    %v2009 = vmul.f32 %v2008, 1.442695
    %v2010 = vpow.pop %v2009
    %v2011 = vld [vmem:[%s8] sm:$0xff]
    %v2012 = vmul.f32 %v2011, %v2010
    %v2013 = vadd.f32 %v2012, %v2004
    %2014 = vst [vmem:[#allocation10] sm:$0xff] %v2004
    %2015 = vst [vmem:[#allocation10 + $0x8] sm:$0xff] %v2010
    %2016 = vst [vmem:[#allocation10 + $0x10] sm:$0xff] %v2013
    // Predicated region
    $region54: #{tpu_custom_call.1} parent=1 // pred_check
      _
    $region55: #{tpu_custom_call.1} parent=1 // pred_check_branch
      %2018 = sbr.rel (0) target = $region57
    $region56: #{tpu_custom_call.1} parent=1 // pred_region
      %s2020 = ssub.s32 384, 384
      %2021 = vsyncadd [#allocation4], %s2020
      %s2023 = sshll.u32 [#allocation10], 4
      %s2024 = int_to_ptr.vmem [resolvable:$true] %s2023
      %2026 = dma.vmem_to_hbm [thread:$0]  %s2024, 384, %s9, [#allocation4]
    $region57: #{tpu_custom_call.1} parent=1 // pred_fallthru
      _
    // Predicated region
    $region58: #{tpu_custom_call.1} parent=1 // pred_check
      _
    $region59: #{tpu_custom_call.1} parent=1 // pred_check_branch
      %2028 = sbr.rel (0) target = $region61
    $region60: #{tpu_custom_call.1} parent=1 // pred_region
      %2029 = dma.done [#allocation4], 384
    $region61: #{tpu_custom_call.1} parent=1 // pred_fallthru
      _
    %2030 = vsyncpa [#allocation3], 1
    %2031 = vsyncpa [#allocation6], 1
    %2032 = vsyncpa [#allocation9], 1
    %2033 = vsyncpa [#allocation4], 1

</llo_original>
